<compile_context>
chip_gen: v6e
topology: v6e:2x2x1
jax: 0.10.0
libtpu: 0.0.40
codegen_flags: <defaults>
</compile_context>

<pallas_src>
import jax
import jax.numpy as jnp
from jax.experimental import pallas as pl
from jax.experimental.pallas import tpu as pltpu

# ---------------------------------------------------------------------------
# Problem sizes (small synthetic shapes consistent with the module's forward)
# ---------------------------------------------------------------------------
B = 2              # batch
T = 485            # raw audio samples (small synthetic length)
K = 10             # first wav2vec2 conv kernel size
KPAD = 16          # lane-friendly padded kernel size (cols K..KPAD-1 are zero)
STRIDE = 5         # first wav2vec2 conv stride
TPRIME = (T - K) // STRIDE + 1   # 96 frames (multiple of 8)
H = 32             # hidden size (synthetic; real model uses 768)
V = 32             # vocab size (wav2vec2-base-960h CTC vocab = 32)
VPAD = 128         # lane-dense padded vocab / output width

# Packed-parameter slab layout: one [168,128] f32 slab, one DMA.  All row
# offsets are multiples of 8 so every static slice starts on a sublane tile.
R_WC = 0      # [KPAD, H]   conv weight (rows K..KPAD-1 zero)
R_BC = 16     # [1, H]      conv bias
R_WP = 24     # [H, H]      feature-projection weight
R_BP = 56     # [1, H]      feature-projection bias
R_A = 64      # [H, H]      folded attention A = wq @ wk.T / sqrt(H)
R_W = 96      # [H, H]      folded attention W = wv @ wo
R_WLM = 128   # [H, VPAD]   lm_head weight (cols V..127 zero)
R_BLM = 160   # [1, VPAD]   lm_head bias  (cols V..127 zero)
SLAB_ROWS = 168
SLAB_COLS = 128


def _has_two_tensorcores() -> bool:
    """True on chips whose single jax device spans 2 TensorCores (v7x, v4/v5p
    megacore), where a 'parallel' grid axis shards work across the cores.
    Detection errors only affect performance, never correctness."""
    try:
        kind = jax.devices()[0].device_kind.lower()
    except Exception:
        return False
    return any(tag in kind for tag in ("v7", "v4", "v5p"))


def _mxu(a, b):
    """bf16 MXU matmul with f32 accumulation (elementwise math stays f32)."""
    return jnp.dot(a.astype(jnp.bfloat16), b.astype(jnp.bfloat16),
                   preferred_element_type=jnp.float32)


def make_logits_kernel(nb):
    """Build a kernel processing `nb` batch elements (nb*TPRIME rows) per step."""

    def logits_kernel(patch_ref, w_ref, out_ref):
        patches = patch_ref[...]                              # [nb*T', KPAD] f32

        # --- static, sublane-aligned slices of the packed parameter slab ---
        wc = w_ref[R_WC:R_WC + KPAD, 0:H]                     # [KPAD, H]
        bc = w_ref[R_BC:R_BC + 1, 0:H]                        # [1, H]
        wp = w_ref[R_WP:R_WP + H, 0:H]                        # [H, H]
        bp = w_ref[R_BP:R_BP + 1, 0:H]                        # [1, H]
        wa = w_ref[R_A:R_A + H, 0:H]                          # [H, H]
        ww = w_ref[R_W:R_W + H, 0:H]                          # [H, H]
        wlm = w_ref[R_WLM:R_WLM + H, :]                       # [H, VPAD]
        blm = w_ref[R_BLM:R_BLM + 1, :]                       # [1, VPAD]

        # --- conv feature extractor (unfolded conv == matmul) + GELU ---
        # TODO(synk): torch nn.GELU defaults to exact erf; the tanh
        # approximation is kept here as the EUP-native fast path.
        feat = jax.nn.gelu(_mxu(patches, wc) + bc)            # [nb*T', H] f32

        # --- layernorm: independent mean / mean-of-squares reductions ---
        mu = jnp.mean(feat, axis=-1, keepdims=True)
        ex2 = jnp.mean(feat * feat, axis=-1, keepdims=True)
        norm = (feat - mu) * jax.lax.rsqrt(ex2 - mu * mu + 1e-5)

        # --- feature projection ---
        h = _mxu(norm, wp) + bp                               # [nb*T', H]

        # --- folded single-head self-attention + residual + LM head, per
        #     batch element (static, sublane-aligned 96-row slices) ---
        for i in range(nb):
            lo = i * TPRIME
            hb = h[lo:lo + TPRIME]                            # [T', H]
            ha = _mxu(hb, wa)                                 # [T', H]
            scores = jax.lax.dot_general(                     # (h A) h^T
                ha.astype(jnp.bfloat16), hb.astype(jnp.bfloat16),
                (((1,), (1,)), ((), ())),
                preferred_element_type=jnp.float32)           # [T', T']
            scores = scores - jnp.max(scores, axis=-1, keepdims=True)
            p = jnp.exp(scores)                               # f32 softmax
            p = p * pl.reciprocal(jnp.sum(p, axis=-1, keepdims=True),
                                  approx=True)
            ctx = _mxu(p, hb)                                 # [T', H]
            hf = hb + _mxu(ctx, ww)                           # residual
            # LM head -> logits (lane-dense 128-wide store)
            out_ref[lo:lo + TPRIME, :] = _mxu(hf, wlm) + blm  # [T', VPAD]

    return logits_kernel


# Per-generation grid choice (module-level constants baked into the jit):
#   dual-TC chips : one batch element per grid step, sharded across cores.
#   single-TC     : both batch elements folded into a single grid step.
NB_PER_STEP = 1 if _has_two_tensorcores() else 2
GRID_STEPS = B // NB_PER_STEP
_DIM_SEMANTICS = ("parallel",) if GRID_STEPS > 1 else ("arbitrary",)
_KERNEL = make_logits_kernel(NB_PER_STEP)


@jax.jit
def logits_only_forward(input_values, param_slab):
    """Equivalent of LogitsOnlyWrapper.forward: returns [B, T', V] logits."""
    # Host-side im2col unfold of the waveform (glue; the conv runs in-kernel).
    # TODO(synk): if this gather/pad glue ever dominates wall clock, DMA the
    # padded waveform and build the K columns with strided reads in-kernel.
    idx = jnp.arange(TPRIME)[:, None] * STRIDE + jnp.arange(K)[None, :]
    patches = input_values[:, idx].astype(jnp.float32)        # [B, T', K]
    patches = jnp.pad(patches, ((0, 0), (0, 0), (0, KPAD - K)))
    patches = patches.reshape(B * TPRIME, KPAD)               # 2-D kernel refs

    rows = NB_PER_STEP * TPRIME
    out = pl.pallas_call(
        _KERNEL,
        out_shape=jax.ShapeDtypeStruct((B * TPRIME, VPAD), jnp.float32),
        grid=(GRID_STEPS,),
        in_specs=[
            pl.BlockSpec((rows, KPAD), lambda i: (i, 0)),
            pl.BlockSpec((SLAB_ROWS, SLAB_COLS), lambda i: (0, 0)),
        ],
        out_specs=pl.BlockSpec((rows, VPAD), lambda i: (i, 0)),
        compiler_params=pltpu.CompilerParams(
            dimension_semantics=_DIM_SEMANTICS),
    )(patches, param_slab)
    # Padded vocab lanes (V..127) are zero-weight columns; slice them away.
    return out.reshape(B, TPRIME, VPAD)[:, :, :V]


def init_params(key):
    """Build the single packed parameter slab [SLAB_ROWS, SLAB_COLS] f32."""
    ks = jax.random.split(key, 8)
    s = 0.05
    wc = jax.random.normal(ks[0], (K, H), jnp.float32) * s    # conv (unfolded)
    wp = jax.random.normal(ks[1], (H, H), jnp.float32) * s    # feature proj
    wq = jax.random.normal(ks[2], (H, H), jnp.float32) * s
    wk = jax.random.normal(ks[3], (H, H), jnp.float32) * s
    wv = jax.random.normal(ks[4], (H, H), jnp.float32) * s
    wo = jax.random.normal(ks[5], (H, H), jnp.float32) * s
    wlm = jax.random.normal(ks[6], (H, V), jnp.float32) * s   # lm_head
    blm = jax.random.normal(ks[7], (1, V), jnp.float32) * s

    # Algebraic single-head attention fold (1/sqrt(H) folded into A):
    #   scores = (h @ A) @ h.T   with   A = wq @ wk.T / sqrt(H)
    #   attn   = (p @ h) @ W     with   W = wv @ wo
    a_mat = (wq @ wk.T) * (1.0 / (H ** 0.5))
    w_mat = wv @ wo

    slab = jnp.zeros((SLAB_ROWS, SLAB_COLS), jnp.float32)
    slab = slab.at[R_WC:R_WC + K, 0:H].set(wc)          # rows K..KPAD-1 stay 0
    # bc (R_BC) and bp (R_BP) are zero biases -> already zero in the slab.
    slab = slab.at[R_WP:R_WP + H, 0:H].set(wp)
    slab = slab.at[R_A:R_A + H, 0:H].set(a_mat)
    slab = slab.at[R_W:R_W + H, 0:H].set(w_mat)
    slab = slab.at[R_WLM:R_WLM + H, 0:V].set(wlm)
    slab = slab.at[R_BLM:R_BLM + 1, 0:V].set(blm)
    return slab


if __name__ == "__main__":
    key = jax.random.PRNGKey(0)
    pkey, xkey = jax.random.split(key)
    param_slab = init_params(pkey)

    # Deterministic synthetic waveform input [B, T] (processor padding /
    # normalization is host-side preprocessing, not part of the wrapped forward).
    input_values = jax.random.normal(xkey, (B, T), jnp.float32)

    logits = logits_only_forward(input_values, param_slab)
    jax.block_until_ready(logits)
    assert logits.shape == (B, TPRIME, V), logits.shape
    assert logits.dtype == jnp.float32
    print("KERNEL_OK")
</pallas_src>

<mosaic_0001>
module attributes {stable_mosaic.version = 11 : i64} {
  func.func @logits_kernel(%arg0: i32, %arg1: memref<192x16xf32, #tpu.memory_space<vmem>>, %arg2: memref<168x128xf32, #tpu.memory_space<vmem>>, %arg3: memref<192x128xf32, #tpu.memory_space<vmem>>) attributes {dimension_semantics = [#tpu.dimension_semantics<arbitrary>], iteration_bounds = array<i64: 1>, scalar_prefetch = 0 : i64, scratch_operands = 0 : i64, tpu.core_type = #tpu.core_type<tc>, window_params = [{transform_indices = @transform_0, window_bounds = array<i64: 192, 16>}, {pipeline_mode = #tpu.pipeline_mode<synchronous>, transform_indices = @transform_1, window_bounds = array<i64: 168, 128>}, {transform_indices = @transform_2, window_bounds = array<i64: 192, 128>}]} {
    %c0 = arith.constant 0 : index
    %c0_0 = arith.constant 0 : index
    %0 = vector.load %arg1[%c0, %c0_0] : memref<192x16xf32, #tpu.memory_space<vmem>>, vector<192x16xf32>
    %c0_1 = arith.constant 0 : index
    %c0_2 = arith.constant 0 : index
    %1 = vector.load %arg2[%c0_1, %c0_2] : memref<168x128xf32, #tpu.memory_space<vmem>>, vector<16x32xf32>
    %c16 = arith.constant 16 : index
    %c0_3 = arith.constant 0 : index
    %2 = vector.load %arg2[%c16, %c0_3] : memref<168x128xf32, #tpu.memory_space<vmem>>, vector<1x32xf32>
    %c24 = arith.constant 24 : index
    %c0_4 = arith.constant 0 : index
    %3 = vector.load %arg2[%c24, %c0_4] : memref<168x128xf32, #tpu.memory_space<vmem>>, vector<32x32xf32>
    %c56 = arith.constant 56 : index
    %c0_5 = arith.constant 0 : index
    %4 = vector.load %arg2[%c56, %c0_5] : memref<168x128xf32, #tpu.memory_space<vmem>>, vector<1x32xf32>
    %c64 = arith.constant 64 : index
    %c0_6 = arith.constant 0 : index
    %5 = vector.load %arg2[%c64, %c0_6] : memref<168x128xf32, #tpu.memory_space<vmem>>, vector<32x32xf32>
    %c96 = arith.constant 96 : index
    %c0_7 = arith.constant 0 : index
    %6 = vector.load %arg2[%c96, %c0_7] : memref<168x128xf32, #tpu.memory_space<vmem>>, vector<32x32xf32>
    %c128 = arith.constant 128 : index
    %c0_8 = arith.constant 0 : index
    %7 = vector.load %arg2[%c128, %c0_8] : memref<168x128xf32, #tpu.memory_space<vmem>>, vector<32x128xf32>
    %c160 = arith.constant 160 : index
    %c0_9 = arith.constant 0 : index
    %8 = vector.load %arg2[%c160, %c0_9] : memref<168x128xf32, #tpu.memory_space<vmem>>, vector<1x128xf32>
    %9 = arith.truncf %0 : vector<192x16xf32> to vector<192x16xbf16>
    %10 = arith.truncf %1 : vector<16x32xf32> to vector<16x32xbf16>
    %cst = arith.constant dense<0.000000e+00> : vector<192x32xf32>
    %11 = tpu.matmul %9, %10, %cst {dimension_numbers = #tpu.dot_dimension_numbers<[1], [0], [0], [1], [0, 0, 1, 1], [], []>} : vector<192x16xbf16>, vector<16x32xbf16>, vector<192x32xf32> -> vector<192x32xf32>
    %12 = vector.broadcast %2 : vector<1x32xf32> to vector<192x32xf32>
    %13 = arith.addf %11, %12 : vector<192x32xf32>
    %14 = arith.mulf %13, %13 : vector<192x32xf32>
    %15 = arith.mulf %13, %14 : vector<192x32xf32>
    %cst_10 = arith.constant 4.471500e-02 : f32
    %16 = vector.broadcast %cst_10 : f32 to vector<192x32xf32>
    %17 = arith.mulf %16, %15 : vector<192x32xf32>
    %18 = arith.addf %13, %17 : vector<192x32xf32>
    %cst_11 = arith.constant 0.797884583 : f32
    %19 = vector.broadcast %cst_11 : f32 to vector<192x32xf32>
    %20 = arith.mulf %19, %18 : vector<192x32xf32>
    %21 = math.tanh %20 : vector<192x32xf32>
    %cst_12 = arith.constant 1.000000e+00 : f32
    %22 = vector.broadcast %cst_12 : f32 to vector<192x32xf32>
    %23 = arith.addf %22, %21 : vector<192x32xf32>
    %cst_13 = arith.constant 5.000000e-01 : f32
    %24 = vector.broadcast %cst_13 : f32 to vector<192x32xf32>
    %25 = arith.mulf %24, %23 : vector<192x32xf32>
    %26 = arith.mulf %13, %25 : vector<192x32xf32>
    %cst_14 = arith.constant dense<0.000000e+00> : vector<192xf32>
    %27 = vector.multi_reduction <add>, %26, %cst_14 [1] : vector<192x32xf32> to vector<192xf32>
    %28 = vector.shape_cast %27 : vector<192xf32> to vector<192x1xf32>
    %cst_15 = arith.constant 3.200000e+01 : f32
    %29 = vector.broadcast %cst_15 : f32 to vector<192x1xf32>
    %30 = arith.divf %28, %29 : vector<192x1xf32>
    %31 = arith.mulf %26, %26 : vector<192x32xf32>
    %cst_16 = arith.constant dense<0.000000e+00> : vector<192xf32>
    %32 = vector.multi_reduction <add>, %31, %cst_16 [1] : vector<192x32xf32> to vector<192xf32>
    %33 = vector.shape_cast %32 : vector<192xf32> to vector<192x1xf32>
    %cst_17 = arith.constant 3.200000e+01 : f32
    %34 = vector.broadcast %cst_17 : f32 to vector<192x1xf32>
    %35 = arith.divf %33, %34 : vector<192x1xf32>
    %36 = vector.broadcast %30 : vector<192x1xf32> to vector<192x32xf32>
    %37 = arith.subf %26, %36 : vector<192x32xf32>
    %38 = arith.mulf %30, %30 : vector<192x1xf32>
    %39 = arith.subf %35, %38 : vector<192x1xf32>
    %cst_18 = arith.constant 9.99999974E-6 : f32
    %40 = vector.broadcast %cst_18 : f32 to vector<192x1xf32>
    %41 = arith.addf %39, %40 : vector<192x1xf32>
    %42 = math.rsqrt %41 : vector<192x1xf32>
    %43 = vector.broadcast %42 : vector<192x1xf32> to vector<192x32xf32>
    %44 = arith.mulf %37, %43 : vector<192x32xf32>
    %45 = arith.truncf %44 : vector<192x32xf32> to vector<192x32xbf16>
    %46 = arith.truncf %3 : vector<32x32xf32> to vector<32x32xbf16>
    %cst_19 = arith.constant dense<0.000000e+00> : vector<192x32xf32>
    %47 = tpu.matmul %45, %46, %cst_19 {dimension_numbers = #tpu.dot_dimension_numbers<[1], [0], [0], [1], [0, 0, 1, 1], [], []>} : vector<192x32xbf16>, vector<32x32xbf16>, vector<192x32xf32> -> vector<192x32xf32>
    %48 = vector.broadcast %4 : vector<1x32xf32> to vector<192x32xf32>
    %49 = arith.addf %47, %48 : vector<192x32xf32>
    %50 = vector.extract_strided_slice %49 {offsets = [0, 0], sizes = [96, 32], strides = [1, 1]} : vector<192x32xf32> to vector<96x32xf32>
    %51 = arith.truncf %50 : vector<96x32xf32> to vector<96x32xbf16>
    %52 = arith.truncf %5 : vector<32x32xf32> to vector<32x32xbf16>
    %cst_20 = arith.constant dense<0.000000e+00> : vector<96x32xf32>
    %53 = tpu.matmul %51, %52, %cst_20 {dimension_numbers = #tpu.dot_dimension_numbers<[1], [0], [0], [1], [0, 0, 1, 1], [], []>} : vector<96x32xbf16>, vector<32x32xbf16>, vector<96x32xf32> -> vector<96x32xf32>
    %54 = arith.truncf %53 : vector<96x32xf32> to vector<96x32xbf16>
    %55 = arith.truncf %50 : vector<96x32xf32> to vector<96x32xbf16>
    %cst_21 = arith.constant dense<0.000000e+00> : vector<96x96xf32>
    %56 = tpu.matmul %54, %55, %cst_21 {dimension_numbers = #tpu.dot_dimension_numbers<[1], [1], [0], [0], [0, 0, 1, 0], [], []>} : vector<96x32xbf16>, vector<96x32xbf16>, vector<96x96xf32> -> vector<96x96xf32>
    %cst_22 = arith.constant dense<0xFF800000> : vector<96xf32>
    %57 = vector.multi_reduction <maximumf>, %56, %cst_22 [1] : vector<96x96xf32> to vector<96xf32>
    %58 = vector.shape_cast %57 : vector<96xf32> to vector<96x1xf32>
    %59 = vector.broadcast %58 : vector<96x1xf32> to vector<96x96xf32>
    %60 = arith.subf %56, %59 : vector<96x96xf32>
    %61 = math.exp %60 : vector<96x96xf32>
    %cst_23 = arith.constant dense<0.000000e+00> : vector<96xf32>
    %62 = vector.multi_reduction <add>, %61, %cst_23 [1] : vector<96x96xf32> to vector<96xf32>
    %63 = vector.shape_cast %62 : vector<96xf32> to vector<96x1xf32>
    %64 = tpu.reciprocal %63 {approx = true} : vector<96x1xf32> -> vector<96x1xf32>
    %65 = vector.broadcast %64 : vector<96x1xf32> to vector<96x96xf32>
    %66 = arith.mulf %61, %65 : vector<96x96xf32>
    %67 = arith.truncf %66 : vector<96x96xf32> to vector<96x96xbf16>
    %68 = arith.truncf %50 : vector<96x32xf32> to vector<96x32xbf16>
    %cst_24 = arith.constant dense<0.000000e+00> : vector<96x32xf32>
    %69 = tpu.matmul %67, %68, %cst_24 {dimension_numbers = #tpu.dot_dimension_numbers<[1], [0], [0], [1], [0, 0, 1, 1], [], []>} : vector<96x96xbf16>, vector<96x32xbf16>, vector<96x32xf32> -> vector<96x32xf32>
    %70 = arith.truncf %69 : vector<96x32xf32> to vector<96x32xbf16>
    %71 = arith.truncf %6 : vector<32x32xf32> to vector<32x32xbf16>
    %cst_25 = arith.constant dense<0.000000e+00> : vector<96x32xf32>
    %72 = tpu.matmul %70, %71, %cst_25 {dimension_numbers = #tpu.dot_dimension_numbers<[1], [0], [0], [1], [0, 0, 1, 1], [], []>} : vector<96x32xbf16>, vector<32x32xbf16>, vector<96x32xf32> -> vector<96x32xf32>
    %73 = arith.addf %50, %72 : vector<96x32xf32>
    %74 = arith.truncf %73 : vector<96x32xf32> to vector<96x32xbf16>
    %75 = arith.truncf %7 : vector<32x128xf32> to vector<32x128xbf16>
    %cst_26 = arith.constant dense<0.000000e+00> : vector<96x128xf32>
    %76 = tpu.matmul %74, %75, %cst_26 {dimension_numbers = #tpu.dot_dimension_numbers<[1], [0], [0], [1], [0, 0, 1, 1], [], []>} : vector<96x32xbf16>, vector<32x128xbf16>, vector<96x128xf32> -> vector<96x128xf32>
    %77 = vector.broadcast %8 : vector<1x128xf32> to vector<96x128xf32>
    %78 = arith.addf %76, %77 : vector<96x128xf32>
    %c0_27 = arith.constant 0 : index
    %c0_28 = arith.constant 0 : index
    %79 = vector.load %arg3[%c0_27, %c0_28] : memref<192x128xf32, #tpu.memory_space<vmem>>, vector<96x128xf32>
    tpu.vector_store %arg3[%c0_27, %c0_28], %78 {strides = array<i32>} : memref<192x128xf32, #tpu.memory_space<vmem>>, vector<96x128xf32>,
    %80 = vector.extract_strided_slice %49 {offsets = [96, 0], sizes = [96, 32], strides = [1, 1]} : vector<192x32xf32> to vector<96x32xf32>
    %81 = arith.truncf %80 : vector<96x32xf32> to vector<96x32xbf16>
    %82 = arith.truncf %5 : vector<32x32xf32> to vector<32x32xbf16>
    %cst_29 = arith.constant dense<0.000000e+00> : vector<96x32xf32>
    %83 = tpu.matmul %81, %82, %cst_29 {dimension_numbers = #tpu.dot_dimension_numbers<[1], [0], [0], [1], [0, 0, 1, 1], [], []>} : vector<96x32xbf16>, vector<32x32xbf16>, vector<96x32xf32> -> vector<96x32xf32>
    %84 = arith.truncf %83 : vector<96x32xf32> to vector<96x32xbf16>
    %85 = arith.truncf %80 : vector<96x32xf32> to vector<96x32xbf16>
    %cst_30 = arith.constant dense<0.000000e+00> : vector<96x96xf32>
    %86 = tpu.matmul %84, %85, %cst_30 {dimension_numbers = #tpu.dot_dimension_numbers<[1], [1], [0], [0], [0, 0, 1, 0], [], []>} : vector<96x32xbf16>, vector<96x32xbf16>, vector<96x96xf32> -> vector<96x96xf32>
    %cst_31 = arith.constant dense<0xFF800000> : vector<96xf32>
    %87 = vector.multi_reduction <maximumf>, %86, %cst_31 [1] : vector<96x96xf32> to vector<96xf32>
    %88 = vector.shape_cast %87 : vector<96xf32> to vector<96x1xf32>
    %89 = vector.broadcast %88 : vector<96x1xf32> to vector<96x96xf32>
    %90 = arith.subf %86, %89 : vector<96x96xf32>
    %91 = math.exp %90 : vector<96x96xf32>
    %cst_32 = arith.constant dense<0.000000e+00> : vector<96xf32>
    %92 = vector.multi_reduction <add>, %91, %cst_32 [1] : vector<96x96xf32> to vector<96xf32>
    %93 = vector.shape_cast %92 : vector<96xf32> to vector<96x1xf32>
    %94 = tpu.reciprocal %93 {approx = true} : vector<96x1xf32> -> vector<96x1xf32>
    %95 = vector.broadcast %94 : vector<96x1xf32> to vector<96x96xf32>
    %96 = arith.mulf %91, %95 : vector<96x96xf32>
    %97 = arith.truncf %96 : vector<96x96xf32> to vector<96x96xbf16>
    %98 = arith.truncf %80 : vector<96x32xf32> to vector<96x32xbf16>
    %cst_33 = arith.constant dense<0.000000e+00> : vector<96x32xf32>
    %99 = tpu.matmul %97, %98, %cst_33 {dimension_numbers = #tpu.dot_dimension_numbers<[1], [0], [0], [1], [0, 0, 1, 1], [], []>} : vector<96x96xbf16>, vector<96x32xbf16>, vector<96x32xf32> -> vector<96x32xf32>
    %100 = arith.truncf %99 : vector<96x32xf32> to vector<96x32xbf16>
    %101 = arith.truncf %6 : vector<32x32xf32> to vector<32x32xbf16>
    %cst_34 = arith.constant dense<0.000000e+00> : vector<96x32xf32>
    %102 = tpu.matmul %100, %101, %cst_34 {dimension_numbers = #tpu.dot_dimension_numbers<[1], [0], [0], [1], [0, 0, 1, 1], [], []>} : vector<96x32xbf16>, vector<32x32xbf16>, vector<96x32xf32> -> vector<96x32xf32>
    %103 = arith.addf %80, %102 : vector<96x32xf32>
    %104 = arith.truncf %103 : vector<96x32xf32> to vector<96x32xbf16>
    %105 = arith.truncf %7 : vector<32x128xf32> to vector<32x128xbf16>
    %cst_35 = arith.constant dense<0.000000e+00> : vector<96x128xf32>
    %106 = tpu.matmul %104, %105, %cst_35 {dimension_numbers = #tpu.dot_dimension_numbers<[1], [0], [0], [1], [0, 0, 1, 1], [], []>} : vector<96x32xbf16>, vector<32x128xbf16>, vector<96x128xf32> -> vector<96x128xf32>
    %107 = vector.broadcast %8 : vector<1x128xf32> to vector<96x128xf32>
    %108 = arith.addf %106, %107 : vector<96x128xf32>
    %c96_36 = arith.constant 96 : index
    %c0_37 = arith.constant 0 : index
    %109 = vector.load %arg3[%c96_36, %c0_37] : memref<192x128xf32, #tpu.memory_space<vmem>>, vector<96x128xf32>
    tpu.vector_store %arg3[%c96_36, %c0_37], %108 {strides = array<i32>} : memref<192x128xf32, #tpu.memory_space<vmem>>, vector<96x128xf32>,
    return
  }
  func.func @transform_0(%arg0: i32) -> (i32, i32) {
    %c0_i32 = arith.constant 0 : i32
    %c0_i32_0 = arith.constant 0 : i32
    return %arg0, %c0_i32 : i32, i32
  }
  func.func @transform_1(%arg0: i32) -> (i32, i32) {
    %c0_i32 = arith.constant 0 : i32
    %c0_i32_0 = arith.constant 0 : i32
    %c0_i32_1 = arith.constant 0 : i32
    return %c0_i32, %c0_i32_0 : i32, i32
  }
  func.func @transform_2(%arg0: i32) -> (i32, i32) {
    %c0_i32 = arith.constant 0 : i32
    %c0_i32_0 = arith.constant 0 : i32
    return %arg0, %c0_i32 : i32, i32
  }
}

</mosaic_0001>

<llo_original>
// kernel: logits_only_forward.1
$region0: #{logits_only_forward.1}
  #allocation0 [shape = 'u32[]', space=smem, size = 0x4, offset = 0x4, fixed_abs, tag = 'smem constant byte address 0x4 - core index']
  #allocation1 [shape = 'u32[144,128]{1,0:T(1,128)}', space=vmem, size = 0x12000, scoped, tag = 'internal scratch']
  %s0 = inlined_call_operand.vmem [shape: f32[192,16], index: 0, kind: input, shape index: {}]
  %s1 = inlined_call_operand.vmem [shape: f32[168,128], index: 1, kind: input, shape index: {}]
  %s2 = inlined_call_operand.vmem [shape: f32[192,128], index: 2, kind: output, shape index: {}]
  %s3 = sld [smem:[#allocation0]]
  $region18: #{logits_only_forward.1} parent=0
    _
  %s5 = ssub.s32 1, %s3
  %s6 = scalar_select 0, %s5, %s3
  // Predicated region
  $region2: #{logits_only_forward.1} parent=0 // pred_check
    _
  $region3: #{logits_only_forward.1} parent=0 // pred_check_branch
    %8 = sbr.rel (0) target = $region5
  $region4: #{logits_only_forward.1} parent=0 // pred_region
    _
  $region5: #{logits_only_forward.1} parent=0 // pred_fallthru
    _
  // Predicated region
  $region6: #{logits_only_forward.1} parent=0 // pred_check
    _
  $region7: #{logits_only_forward.1} parent=0 // pred_check_branch
    %10 = sbr.rel (0) target = $region9
  $region8: #{logits_only_forward.1} parent=0 // pred_region
    _
  $region9: #{logits_only_forward.1} parent=0 // pred_fallthru
    _
  %v12 = vld [vmem:[%s0] sm:$0xff]
  %v13 = vld [vmem:[%s0 + $0x8] sm:$0xff]
  %v14 = vld [vmem:[%s0 + $0x10] sm:$0xff]
  %v15 = vld [vmem:[%s0 + $0x18] sm:$0xff]
  %v16 = vld [vmem:[%s0 + $0x20] sm:$0xff]
  %v17 = vld [vmem:[%s0 + $0x28] sm:$0xff]
  %v18 = vld [vmem:[%s0 + $0x30] sm:$0xff]
  %v19 = vld [vmem:[%s0 + $0x38] sm:$0xff]
  %v20 = vld [vmem:[%s0 + $0x40] sm:$0xff]
  %v21 = vld [vmem:[%s0 + $0x48] sm:$0xff]
  %v22 = vld [vmem:[%s0 + $0x50] sm:$0xff]
  %v23 = vld [vmem:[%s0 + $0x58] sm:$0xff]
  %v24 = vld [vmem:[%s0 + $0x60] sm:$0xff]
  %v25 = vld [vmem:[%s0 + $0x68] sm:$0xff]
  %v26 = vld [vmem:[%s0 + $0x70] sm:$0xff]
  %v27 = vld [vmem:[%s0 + $0x78] sm:$0xff]
  %v28 = vld [vmem:[%s0 + $0x80] sm:$0xff]
  %v29 = vld [vmem:[%s0 + $0x88] sm:$0xff]
  %v30 = vld [vmem:[%s0 + $0x90] sm:$0xff]
  %v31 = vld [vmem:[%s0 + $0x98] sm:$0xff]
  %v32 = vld [vmem:[%s0 + $0xa0] sm:$0xff]
  %v33 = vld [vmem:[%s0 + $0xa8] sm:$0xff]
  %v34 = vld [vmem:[%s0 + $0xb0] sm:$0xff]
  %v35 = vld [vmem:[%s0 + $0xb8] sm:$0xff]
  %v36 = vld [vmem:[%s1] sm:$0xff]
  %v37 = vld [vmem:[%s1 + $0x8] sm:$0xff]
  %v38 = vld [vmem:[%s1 + $0x10] sm:$0x1]
  %v39 = vld [vmem:[%s1 + $0x18] sm:$0xff]
  %v40 = vld [vmem:[%s1 + $0x20] sm:$0xff]
  %v41 = vld [vmem:[%s1 + $0x28] sm:$0xff]
  %v42 = vld [vmem:[%s1 + $0x30] sm:$0xff]
  %v43 = vld [vmem:[%s1 + $0x38] sm:$0x1]
  %v44 = vld [vmem:[%s1 + $0x40] sm:$0xff]
  %v45 = vld [vmem:[%s1 + $0x48] sm:$0xff]
  %v46 = vld [vmem:[%s1 + $0x50] sm:$0xff]
  %v47 = vld [vmem:[%s1 + $0x58] sm:$0xff]
  %v48 = vld [vmem:[%s1 + $0x60] sm:$0xff]
  %v49 = vld [vmem:[%s1 + $0x68] sm:$0xff]
  %v50 = vld [vmem:[%s1 + $0x70] sm:$0xff]
  %v51 = vld [vmem:[%s1 + $0x78] sm:$0xff]
  %v52 = vld [vmem:[%s1 + $0x80] sm:$0xff]
  %v53 = vld [vmem:[%s1 + $0x88] sm:$0xff]
  %v54 = vld [vmem:[%s1 + $0x90] sm:$0xff]
  %v55 = vld [vmem:[%s1 + $0x98] sm:$0xff]
  %v56 = vld [vmem:[%s1 + $0xa0] sm:$0x1]
  %v57 = vpack.c.bf16 %v13, %v12
  %v58 = vpack.c.bf16 %v15, %v14
  %v59 = vpack.c.bf16 %v17, %v16
  %v60 = vpack.c.bf16 %v19, %v18
  %v61 = vpack.c.bf16 %v21, %v20
  %v62 = vpack.c.bf16 %v23, %v22
  %v63 = vpack.c.bf16 %v25, %v24
  %v64 = vpack.c.bf16 %v27, %v26
  %v65 = vpack.c.bf16 %v29, %v28
  %v66 = vpack.c.bf16 %v31, %v30
  %v67 = vpack.c.bf16 %v33, %v32
  %v68 = vpack.c.bf16 %v35, %v34
  %v69 = vpack.c.bf16 %v37, %v36
  %v70 = vlaneseq
  %v71 = vshrl.u32 %v70, 7
  %v72 = vsub.s32 0, %v71
  %v73 = vrot.slane %v38, %v72
  %vm74 = vcmask 130048
  %v76 = vsel %vm74, %v57, 0
  %v79 = vsel %vm74, %v58, 0
  %v82 = vsel %vm74, %v59, 0
  %v85 = vsel %vm74, %v60, 0
  %v88 = vsel %vm74, %v61, 0
  %v91 = vsel %vm74, %v62, 0
  %v94 = vsel %vm74, %v63, 0
  %v97 = vsel %vm74, %v64, 0
  %v100 = vsel %vm74, %v65, 0
  %v103 = vsel %vm74, %v66, 0
  %v106 = vsel %vm74, %v67, 0
  %v109 = vsel %vm74, %v68, 0
  %111 = vmatprep.subr.bf16.mxu0 0
  %112 = vmatpush1.bf16.msra.mxu0 0
  %113 = vmatprep.subr.bf16.mxu0 0
  %114 = vmatpush1.bf16.msra.mxu0 0
  %115 = vmatprep.subr.bf16.mxu0 0
  %116 = vmatpush1.bf16.msra.mxu0 0
  %117 = vmatprep.subr.bf16.mxu0 0
  %118 = vmatpush1.bf16.msra.mxu0 0
  %119 = vmatprep.subr.bf16.mxu0 0
  %120 = vmatpush1.bf16.msra.mxu0 0
  %121 = vmatprep.subr.bf16.mxu0 0
  %122 = vmatpush1.bf16.msra.mxu0 0
  %123 = vmatprep.subr.bf16.mxu0 0
  %124 = vmatpush1.bf16.msra.mxu0 0
  %125 = vmatprep.subr.bf16.mxu0 0
  %126 = vmatpush1.bf16.msra.mxu0 %v69
  %127 = vmatprep.subr.bf16.mxu0 0
  %128 = vmatpush2.bf16.msra.mxu0 0
  %129 = vmatprep.subr.bf16.mxu0 0
  %130 = vmatpush2.bf16.msra.mxu0 0
  %131 = vmatprep.subr.bf16.mxu0 0
  %132 = vmatpush2.bf16.msra.mxu0 0
  %133 = vmatprep.subr.bf16.mxu0 0
  %134 = vmatpush2.bf16.msra.mxu0 0
  %135 = vmatprep.subr.bf16.mxu0 0
  %136 = vmatpush2.bf16.msra.mxu0 0
  %137 = vmatprep.subr.bf16.mxu0 0
  %138 = vmatpush2.bf16.msra.mxu0 0
  %139 = vmatprep.subr.bf16.mxu0 0
  %140 = vmatpush2.bf16.msra.mxu0 0
  %141 = vmatprep.subr.bf16.mxu0 0
  %142 = vmatpush2.bf16.msra.mxu0 0
  %143 = vmatprep.mubr.bf16.mxu0 0
  %144 = vmatmul.mubr.bf16.gmra.mxu0 %v76
  %v145 = vpop.f32.mrf.mxu0
  %v146 = vadd.f32 %v73, %v145
  %v147 = vpop.f32.mrf.mxu0
  %v148 = vpop.f32.mrf.mxu0
  %v149 = vadd.f32 %v73, %v148
  %v150 = vpop.f32.mrf.mxu0
  %151 = vmatprep.mubr.bf16.mxu0 0
  %152 = vmatmul.mubr.bf16.gmra.mxu0 %v79
  %v153 = vpop.f32.mrf.mxu0
  %v154 = vadd.f32 %v73, %v153
  %v155 = vpop.f32.mrf.mxu0
  %v156 = vpop.f32.mrf.mxu0
  %v157 = vadd.f32 %v73, %v156
  %v158 = vpop.f32.mrf.mxu0
  %159 = vmatprep.mubr.bf16.mxu0 0
  %160 = vmatmul.mubr.bf16.gmra.mxu0 %v82
  %v161 = vpop.f32.mrf.mxu0
  %v162 = vadd.f32 %v73, %v161
  %v163 = vpop.f32.mrf.mxu0
  %v164 = vpop.f32.mrf.mxu0
  %v165 = vadd.f32 %v73, %v164
  %v166 = vpop.f32.mrf.mxu0
  %167 = vmatprep.mubr.bf16.mxu0 0
  %168 = vmatmul.mubr.bf16.gmra.mxu0 %v85
  %v169 = vpop.f32.mrf.mxu0
  %v170 = vadd.f32 %v73, %v169
  %v171 = vpop.f32.mrf.mxu0
  %v172 = vpop.f32.mrf.mxu0
  %v173 = vadd.f32 %v73, %v172
  %v174 = vpop.f32.mrf.mxu0
  %175 = vmatprep.mubr.bf16.mxu0 0
  %176 = vmatmul.mubr.bf16.gmra.mxu0 %v88
  %v177 = vpop.f32.mrf.mxu0
  %v178 = vadd.f32 %v73, %v177
  %v179 = vpop.f32.mrf.mxu0
  %v180 = vpop.f32.mrf.mxu0
  %v181 = vadd.f32 %v73, %v180
  %v182 = vpop.f32.mrf.mxu0
  %183 = vmatprep.mubr.bf16.mxu0 0
  %184 = vmatmul.mubr.bf16.gmra.mxu0 %v91
  %v185 = vpop.f32.mrf.mxu0
  %v186 = vadd.f32 %v73, %v185
  %v187 = vpop.f32.mrf.mxu0
  %v188 = vpop.f32.mrf.mxu0
  %v189 = vadd.f32 %v73, %v188
  %v190 = vpop.f32.mrf.mxu0
  %191 = vmatprep.mubr.bf16.mxu0 0
  %192 = vmatmul.mubr.bf16.gmra.mxu0 %v94
  %v193 = vpop.f32.mrf.mxu0
  %v194 = vadd.f32 %v73, %v193
  %v195 = vpop.f32.mrf.mxu0
  %v196 = vpop.f32.mrf.mxu0
  %v197 = vadd.f32 %v73, %v196
  %v198 = vpop.f32.mrf.mxu0
  %199 = vmatprep.mubr.bf16.mxu0 0
  %200 = vmatmul.mubr.bf16.gmra.mxu0 %v97
  %v201 = vpop.f32.mrf.mxu0
  %v202 = vadd.f32 %v73, %v201
  %v203 = vpop.f32.mrf.mxu0
  %v204 = vpop.f32.mrf.mxu0
  %v205 = vadd.f32 %v73, %v204
  %v206 = vpop.f32.mrf.mxu0
  %207 = vmatprep.mubr.bf16.mxu0 0
  %208 = vmatmul.mubr.bf16.gmra.mxu0 %v100
  %v209 = vpop.f32.mrf.mxu0
  %v210 = vadd.f32 %v73, %v209
  %v211 = vpop.f32.mrf.mxu0
  %v212 = vpop.f32.mrf.mxu0
  %v213 = vadd.f32 %v73, %v212
  %v214 = vpop.f32.mrf.mxu0
  %215 = vmatprep.mubr.bf16.mxu0 0
  %216 = vmatmul.mubr.bf16.gmra.mxu0 %v103
  %v217 = vpop.f32.mrf.mxu0
  %v218 = vadd.f32 %v73, %v217
  %v219 = vpop.f32.mrf.mxu0
  %v220 = vpop.f32.mrf.mxu0
  %v221 = vadd.f32 %v73, %v220
  %v222 = vpop.f32.mrf.mxu0
  %223 = vmatprep.mubr.bf16.mxu0 0
  %224 = vmatmul.mubr.bf16.gmra.mxu0 %v106
  %v225 = vpop.f32.mrf.mxu0
  %v226 = vadd.f32 %v73, %v225
  %v227 = vpop.f32.mrf.mxu0
  %v228 = vpop.f32.mrf.mxu0
  %v229 = vadd.f32 %v73, %v228
  %v230 = vpop.f32.mrf.mxu0
  %231 = vmatprep.mubr.bf16.mxu0 0
  %232 = vmatmul.mubr.bf16.gmra.mxu0 %v109
  %v233 = vpop.f32.mrf.mxu0
  %v234 = vadd.f32 %v73, %v233
  %v235 = vpop.f32.mrf.mxu0
  %v236 = vpop.f32.mrf.mxu0
  %v237 = vadd.f32 %v73, %v236
  %v238 = vpop.f32.mrf.mxu0
  %239 = vdwg.mxu0
  %v240 = vmul.f32 %v146, %v146
  %v241 = vmul.f32 %v149, %v149
  %v242 = vmul.f32 %v154, %v154
  %v243 = vmul.f32 %v157, %v157
  %v244 = vmul.f32 %v162, %v162
  %v245 = vmul.f32 %v165, %v165
  %v246 = vmul.f32 %v170, %v170
  %v247 = vmul.f32 %v173, %v173
  %v248 = vmul.f32 %v178, %v178
  %v249 = vmul.f32 %v181, %v181
  %v250 = vmul.f32 %v186, %v186
  %v251 = vmul.f32 %v189, %v189
  %v252 = vmul.f32 %v194, %v194
  %v253 = vmul.f32 %v197, %v197
  %v254 = vmul.f32 %v202, %v202
  %v255 = vmul.f32 %v205, %v205
  %v256 = vmul.f32 %v210, %v210
  %v257 = vmul.f32 %v213, %v213
  %v258 = vmul.f32 %v218, %v218
  %v259 = vmul.f32 %v221, %v221
  %v260 = vmul.f32 %v226, %v226
  %v261 = vmul.f32 %v229, %v229
  %v262 = vmul.f32 %v234, %v234
  %v263 = vmul.f32 %v237, %v237
  %v264 = vmul.f32 %v146, %v240
  %v265 = vmul.f32 %v149, %v241
  %v266 = vmul.f32 %v154, %v242
  %v267 = vmul.f32 %v157, %v243
  %v268 = vmul.f32 %v162, %v244
  %v269 = vmul.f32 %v165, %v245
  %v270 = vmul.f32 %v170, %v246
  %v271 = vmul.f32 %v173, %v247
  %v272 = vmul.f32 %v178, %v248
  %v273 = vmul.f32 %v181, %v249
  %v274 = vmul.f32 %v186, %v250
  %v275 = vmul.f32 %v189, %v251
  %v276 = vmul.f32 %v194, %v252
  %v277 = vmul.f32 %v197, %v253
  %v278 = vmul.f32 %v202, %v254
  %v279 = vmul.f32 %v205, %v255
  %v280 = vmul.f32 %v210, %v256
  %v281 = vmul.f32 %v213, %v257
  %v282 = vmul.f32 %v218, %v258
  %v283 = vmul.f32 %v221, %v259
  %v284 = vmul.f32 %v226, %v260
  %v285 = vmul.f32 %v229, %v261
  %v286 = vmul.f32 %v234, %v262
  %v287 = vmul.f32 %v237, %v263
  %v288 = vmul.f32 %v264, 0.044715
  %v289 = vmul.f32 %v265, 0.044715
  %v290 = vmul.f32 %v266, 0.044715
  %v291 = vmul.f32 %v267, 0.044715
  %v292 = vmul.f32 %v268, 0.044715
  %v293 = vmul.f32 %v269, 0.044715
  %v294 = vmul.f32 %v270, 0.044715
  %v295 = vmul.f32 %v271, 0.044715
  %v296 = vmul.f32 %v272, 0.044715
  %v297 = vmul.f32 %v273, 0.044715
  %v298 = vmul.f32 %v274, 0.044715
  %v299 = vmul.f32 %v275, 0.044715
  %v300 = vmul.f32 %v276, 0.044715
  %v301 = vmul.f32 %v277, 0.044715
  %v302 = vmul.f32 %v278, 0.044715
  %v303 = vmul.f32 %v279, 0.044715
  %v304 = vmul.f32 %v280, 0.044715
  %v305 = vmul.f32 %v281, 0.044715
  %v306 = vmul.f32 %v282, 0.044715
  %v307 = vmul.f32 %v283, 0.044715
  %v308 = vmul.f32 %v284, 0.044715
  %v309 = vmul.f32 %v285, 0.044715
  %v310 = vmul.f32 %v286, 0.044715
  %v311 = vmul.f32 %v287, 0.044715
  %v312 = vadd.f32 %v146, %v288
  %v313 = vadd.f32 %v149, %v289
  %v314 = vadd.f32 %v154, %v290
  %v315 = vadd.f32 %v157, %v291
  %v316 = vadd.f32 %v162, %v292
  %v317 = vadd.f32 %v165, %v293
  %v318 = vadd.f32 %v170, %v294
  %v319 = vadd.f32 %v173, %v295
  %v320 = vadd.f32 %v178, %v296
  %v321 = vadd.f32 %v181, %v297
  %v322 = vadd.f32 %v186, %v298
  %v323 = vadd.f32 %v189, %v299
  %v324 = vadd.f32 %v194, %v300
  %v325 = vadd.f32 %v197, %v301
  %v326 = vadd.f32 %v202, %v302
  %v327 = vadd.f32 %v205, %v303
  %v328 = vadd.f32 %v210, %v304
  %v329 = vadd.f32 %v213, %v305
  %v330 = vadd.f32 %v218, %v306
  %v331 = vadd.f32 %v221, %v307
  %v332 = vadd.f32 %v226, %v308
  %v333 = vadd.f32 %v229, %v309
  %v334 = vadd.f32 %v234, %v310
  %v335 = vadd.f32 %v237, %v311
  %v336 = vmul.f32 %v312, 0.7978846
  %v337 = vmul.f32 %v313, 0.7978846
  %v338 = vmul.f32 %v314, 0.7978846
  %v339 = vmul.f32 %v315, 0.7978846
  %v340 = vmul.f32 %v316, 0.7978846
  %v341 = vmul.f32 %v317, 0.7978846
  %v342 = vmul.f32 %v318, 0.7978846
  %v343 = vmul.f32 %v319, 0.7978846
  %v344 = vmul.f32 %v320, 0.7978846
  %v345 = vmul.f32 %v321, 0.7978846
  %v346 = vmul.f32 %v322, 0.7978846
  %v347 = vmul.f32 %v323, 0.7978846
  %v348 = vmul.f32 %v324, 0.7978846
  %v349 = vmul.f32 %v325, 0.7978846
  %v350 = vmul.f32 %v326, 0.7978846
  %v351 = vmul.f32 %v327, 0.7978846
  %v352 = vmul.f32 %v328, 0.7978846
  %v353 = vmul.f32 %v329, 0.7978846
  %v354 = vmul.f32 %v330, 0.7978846
  %v355 = vmul.f32 %v331, 0.7978846
  %v356 = vmul.f32 %v332, 0.7978846
  %v357 = vmul.f32 %v333, 0.7978846
  %v358 = vmul.f32 %v334, 0.7978846
  %v359 = vmul.f32 %v335, 0.7978846
  %v360 = vtanh.pop %v336
  %v361 = vtanh.pop %v337
  %v362 = vtanh.pop %v338
  %v363 = vtanh.pop %v339
  %v364 = vtanh.pop %v340
  %v365 = vtanh.pop %v341
  %v366 = vtanh.pop %v342
  %v367 = vtanh.pop %v343
  %v368 = vtanh.pop %v344
  %v369 = vtanh.pop %v345
  %v370 = vtanh.pop %v346
  %v371 = vtanh.pop %v347
  %v372 = vtanh.pop %v348
  %v373 = vtanh.pop %v349
  %v374 = vtanh.pop %v350
  %v375 = vtanh.pop %v351
  %v376 = vtanh.pop %v352
  %v377 = vtanh.pop %v353
  %v378 = vtanh.pop %v354
  %v379 = vtanh.pop %v355
  %v380 = vtanh.pop %v356
  %v381 = vtanh.pop %v357
  %v382 = vtanh.pop %v358
  %v383 = vtanh.pop %v359
  %v384 = vadd.f32 %v360, 1.0
  %v385 = vadd.f32 %v361, 1.0
  %v386 = vadd.f32 %v362, 1.0
  %v387 = vadd.f32 %v363, 1.0
  %v388 = vadd.f32 %v364, 1.0
  %v389 = vadd.f32 %v365, 1.0
  %v390 = vadd.f32 %v366, 1.0
  %v391 = vadd.f32 %v367, 1.0
  %v392 = vadd.f32 %v368, 1.0
  %v393 = vadd.f32 %v369, 1.0
  %v394 = vadd.f32 %v370, 1.0
  %v395 = vadd.f32 %v371, 1.0
  %v396 = vadd.f32 %v372, 1.0
  %v397 = vadd.f32 %v373, 1.0
  %v398 = vadd.f32 %v374, 1.0
  %v399 = vadd.f32 %v375, 1.0
  %v400 = vadd.f32 %v376, 1.0
  %v401 = vadd.f32 %v377, 1.0
  %v402 = vadd.f32 %v378, 1.0
  %v403 = vadd.f32 %v379, 1.0
  %v404 = vadd.f32 %v380, 1.0
  %v405 = vadd.f32 %v381, 1.0
  %v406 = vadd.f32 %v382, 1.0
  %v407 = vadd.f32 %v383, 1.0
  %v408 = vmul.f32 %v384, 0.5
  %v409 = vmul.f32 %v385, 0.5
  %v410 = vmul.f32 %v386, 0.5
  %v411 = vmul.f32 %v387, 0.5
  %v412 = vmul.f32 %v388, 0.5
  %v413 = vmul.f32 %v389, 0.5
  %v414 = vmul.f32 %v390, 0.5
  %v415 = vmul.f32 %v391, 0.5
  %v416 = vmul.f32 %v392, 0.5
  %v417 = vmul.f32 %v393, 0.5
  %v418 = vmul.f32 %v394, 0.5
  %v419 = vmul.f32 %v395, 0.5
  %v420 = vmul.f32 %v396, 0.5
  %v421 = vmul.f32 %v397, 0.5
  %v422 = vmul.f32 %v398, 0.5
  %v423 = vmul.f32 %v399, 0.5
  %v424 = vmul.f32 %v400, 0.5
  %v425 = vmul.f32 %v401, 0.5
  %v426 = vmul.f32 %v402, 0.5
  %v427 = vmul.f32 %v403, 0.5
  %v428 = vmul.f32 %v404, 0.5
  %v429 = vmul.f32 %v405, 0.5
  %v430 = vmul.f32 %v406, 0.5
  %v431 = vmul.f32 %v407, 0.5
  %v432 = vmul.f32 %v146, %v408
  %v433 = vmul.f32 %v149, %v409
  %v434 = vmul.f32 %v154, %v410
  %v435 = vmul.f32 %v157, %v411
  %v436 = vmul.f32 %v162, %v412
  %v437 = vmul.f32 %v165, %v413
  %v438 = vmul.f32 %v170, %v414
  %v439 = vmul.f32 %v173, %v415
  %v440 = vmul.f32 %v178, %v416
  %v441 = vmul.f32 %v181, %v417
  %v442 = vmul.f32 %v186, %v418
  %v443 = vmul.f32 %v189, %v419
  %v444 = vmul.f32 %v194, %v420
  %v445 = vmul.f32 %v197, %v421
  %v446 = vmul.f32 %v202, %v422
  %v447 = vmul.f32 %v205, %v423
  %v448 = vmul.f32 %v210, %v424
  %v449 = vmul.f32 %v213, %v425
  %v450 = vmul.f32 %v218, %v426
  %v451 = vmul.f32 %v221, %v427
  %v452 = vmul.f32 %v226, %v428
  %v453 = vmul.f32 %v229, %v429
  %v454 = vmul.f32 %v234, %v430
  %v455 = vmul.f32 %v237, %v431
  %vm456 = vcmask 261120
  %v457 = vsel %vm456, %v432, 0.0
  %458 = vadd.xlane.f32.xlu0 %v457
  %v459 = vpop.xlane.xlu0 %458
  %v460 = vsel %vm456, %v433, 0.0
  %461 = vadd.xlane.f32.xlu0 %v460
  %v462 = vpop.xlane.xlu0 %461
  %v463 = vsel %vm456, %v434, 0.0
  %464 = vadd.xlane.f32.xlu0 %v463
  %v465 = vpop.xlane.xlu0 %464
  %v466 = vsel %vm456, %v435, 0.0
  %467 = vadd.xlane.f32.xlu0 %v466
  %v468 = vpop.xlane.xlu0 %467
  %v469 = vsel %vm456, %v436, 0.0
  %470 = vadd.xlane.f32.xlu0 %v469
  %v471 = vpop.xlane.xlu0 %470
  %v472 = vsel %vm456, %v437, 0.0
  %473 = vadd.xlane.f32.xlu0 %v472
  %v474 = vpop.xlane.xlu0 %473
  %v475 = vsel %vm456, %v438, 0.0
  %476 = vadd.xlane.f32.xlu0 %v475
  %v477 = vpop.xlane.xlu0 %476
  %v478 = vsel %vm456, %v439, 0.0
  %479 = vadd.xlane.f32.xlu0 %v478
  %v480 = vpop.xlane.xlu0 %479
  %v481 = vsel %vm456, %v440, 0.0
  %482 = vadd.xlane.f32.xlu0 %v481
  %v483 = vpop.xlane.xlu0 %482
  %v484 = vsel %vm456, %v441, 0.0
  %485 = vadd.xlane.f32.xlu0 %v484
  %v486 = vpop.xlane.xlu0 %485
  %v487 = vsel %vm456, %v442, 0.0
  %488 = vadd.xlane.f32.xlu0 %v487
  %v489 = vpop.xlane.xlu0 %488
  %v490 = vsel %vm456, %v443, 0.0
  %491 = vadd.xlane.f32.xlu0 %v490
  %v492 = vpop.xlane.xlu0 %491
  %v493 = vsel %vm456, %v444, 0.0
  %494 = vadd.xlane.f32.xlu0 %v493
  %v495 = vpop.xlane.xlu0 %494
  %v496 = vsel %vm456, %v445, 0.0
  %497 = vadd.xlane.f32.xlu0 %v496
  %v498 = vpop.xlane.xlu0 %497
  %v499 = vsel %vm456, %v446, 0.0
  %500 = vadd.xlane.f32.xlu0 %v499
  %v501 = vpop.xlane.xlu0 %500
  %v502 = vsel %vm456, %v447, 0.0
  %503 = vadd.xlane.f32.xlu0 %v502
  %v504 = vpop.xlane.xlu0 %503
  %v505 = vsel %vm456, %v448, 0.0
  %506 = vadd.xlane.f32.xlu0 %v505
  %v507 = vpop.xlane.xlu0 %506
  %v508 = vsel %vm456, %v449, 0.0
  %509 = vadd.xlane.f32.xlu0 %v508
  %v510 = vpop.xlane.xlu0 %509
  %v511 = vsel %vm456, %v450, 0.0
  %512 = vadd.xlane.f32.xlu0 %v511
  %v513 = vpop.xlane.xlu0 %512
  %v514 = vsel %vm456, %v451, 0.0
  %515 = vadd.xlane.f32.xlu0 %v514
  %v516 = vpop.xlane.xlu0 %515
  %v517 = vsel %vm456, %v452, 0.0
  %518 = vadd.xlane.f32.xlu0 %v517
  %v519 = vpop.xlane.xlu0 %518
  %v520 = vsel %vm456, %v453, 0.0
  %521 = vadd.xlane.f32.xlu0 %v520
  %v522 = vpop.xlane.xlu0 %521
  %v523 = vsel %vm456, %v454, 0.0
  %524 = vadd.xlane.f32.xlu0 %v523
  %v525 = vpop.xlane.xlu0 %524
  %v526 = vsel %vm456, %v455, 0.0
  %527 = vadd.xlane.f32.xlu0 %v526
  %v528 = vpop.xlane.xlu0 %527
  %v529 = vrcp.pop 32.0
  %v530 = vmul.f32 %v459, %v529
  %v531 = vmul.f32 %v462, %v529
  %v532 = vmul.f32 %v465, %v529
  %v533 = vmul.f32 %v468, %v529
  %v534 = vmul.f32 %v471, %v529
  %v535 = vmul.f32 %v474, %v529
  %v536 = vmul.f32 %v477, %v529
  %v537 = vmul.f32 %v480, %v529
  %v538 = vmul.f32 %v483, %v529
  %v539 = vmul.f32 %v486, %v529
  %v540 = vmul.f32 %v489, %v529
  %v541 = vmul.f32 %v492, %v529
  %v542 = vmul.f32 %v495, %v529
  %v543 = vmul.f32 %v498, %v529
  %v544 = vmul.f32 %v501, %v529
  %v545 = vmul.f32 %v504, %v529
  %v546 = vmul.f32 %v507, %v529
  %v547 = vmul.f32 %v510, %v529
  %v548 = vmul.f32 %v513, %v529
  %v549 = vmul.f32 %v516, %v529
  %v550 = vmul.f32 %v519, %v529
  %v551 = vmul.f32 %v522, %v529
  %v552 = vmul.f32 %v525, %v529
  %v553 = vmul.f32 %v528, %v529
  %v554 = vmul.f32 %v432, %v432
  %v555 = vmul.f32 %v433, %v433
  %v556 = vmul.f32 %v434, %v434
  %v557 = vmul.f32 %v435, %v435
  %v558 = vmul.f32 %v436, %v436
  %v559 = vmul.f32 %v437, %v437
  %v560 = vmul.f32 %v438, %v438
  %v561 = vmul.f32 %v439, %v439
  %v562 = vmul.f32 %v440, %v440
  %v563 = vmul.f32 %v441, %v441
  %v564 = vmul.f32 %v442, %v442
  %v565 = vmul.f32 %v443, %v443
  %v566 = vmul.f32 %v444, %v444
  %v567 = vmul.f32 %v445, %v445
  %v568 = vmul.f32 %v446, %v446
  %v569 = vmul.f32 %v447, %v447
  %v570 = vmul.f32 %v448, %v448
  %v571 = vmul.f32 %v449, %v449
  %v572 = vmul.f32 %v450, %v450
  %v573 = vmul.f32 %v451, %v451
  %v574 = vmul.f32 %v452, %v452
  %v575 = vmul.f32 %v453, %v453
  %v576 = vmul.f32 %v454, %v454
  %v577 = vmul.f32 %v455, %v455
  %v578 = vsel %vm456, %v554, 0.0
  %579 = vadd.xlane.f32.xlu0 %v578
  %v580 = vpop.xlane.xlu0 %579
  %v581 = vsel %vm456, %v555, 0.0
  %582 = vadd.xlane.f32.xlu0 %v581
  %v583 = vpop.xlane.xlu0 %582
  %v584 = vsel %vm456, %v556, 0.0
  %585 = vadd.xlane.f32.xlu0 %v584
  %v586 = vpop.xlane.xlu0 %585
  %v587 = vsel %vm456, %v557, 0.0
  %588 = vadd.xlane.f32.xlu0 %v587
  %v589 = vpop.xlane.xlu0 %588
  %v590 = vsel %vm456, %v558, 0.0
  %591 = vadd.xlane.f32.xlu0 %v590
  %v592 = vpop.xlane.xlu0 %591
  %v593 = vsel %vm456, %v559, 0.0
  %594 = vadd.xlane.f32.xlu0 %v593
  %v595 = vpop.xlane.xlu0 %594
  %v596 = vsel %vm456, %v560, 0.0
  %597 = vadd.xlane.f32.xlu0 %v596
  %v598 = vpop.xlane.xlu0 %597
  %v599 = vsel %vm456, %v561, 0.0
  %600 = vadd.xlane.f32.xlu0 %v599
  %v601 = vpop.xlane.xlu0 %600
  %v602 = vsel %vm456, %v562, 0.0
  %603 = vadd.xlane.f32.xlu0 %v602
  %v604 = vpop.xlane.xlu0 %603
  %v605 = vsel %vm456, %v563, 0.0
  %606 = vadd.xlane.f32.xlu0 %v605
  %v607 = vpop.xlane.xlu0 %606
  %v608 = vsel %vm456, %v564, 0.0
  %609 = vadd.xlane.f32.xlu0 %v608
  %v610 = vpop.xlane.xlu0 %609
  %v611 = vsel %vm456, %v565, 0.0
  %612 = vadd.xlane.f32.xlu0 %v611
  %v613 = vpop.xlane.xlu0 %612
  %v614 = vsel %vm456, %v566, 0.0
  %615 = vadd.xlane.f32.xlu0 %v614
  %v616 = vpop.xlane.xlu0 %615
  %v617 = vsel %vm456, %v567, 0.0
  %618 = vadd.xlane.f32.xlu0 %v617
  %v619 = vpop.xlane.xlu0 %618
  %v620 = vsel %vm456, %v568, 0.0
  %621 = vadd.xlane.f32.xlu0 %v620
  %v622 = vpop.xlane.xlu0 %621
  %v623 = vsel %vm456, %v569, 0.0
  %624 = vadd.xlane.f32.xlu0 %v623
  %v625 = vpop.xlane.xlu0 %624
  %v626 = vsel %vm456, %v570, 0.0
  %627 = vadd.xlane.f32.xlu0 %v626
  %v628 = vpop.xlane.xlu0 %627
  %v629 = vsel %vm456, %v571, 0.0
  %630 = vadd.xlane.f32.xlu0 %v629
  %v631 = vpop.xlane.xlu0 %630
  %v632 = vsel %vm456, %v572, 0.0
  %633 = vadd.xlane.f32.xlu0 %v632
  %v634 = vpop.xlane.xlu0 %633
  %v635 = vsel %vm456, %v573, 0.0
  %636 = vadd.xlane.f32.xlu0 %v635
  %v637 = vpop.xlane.xlu0 %636
  %v638 = vsel %vm456, %v574, 0.0
  %639 = vadd.xlane.f32.xlu0 %v638
  %v640 = vpop.xlane.xlu0 %639
  %v641 = vsel %vm456, %v575, 0.0
  %642 = vadd.xlane.f32.xlu0 %v641
  %v643 = vpop.xlane.xlu0 %642
  %v644 = vsel %vm456, %v576, 0.0
  %645 = vadd.xlane.f32.xlu0 %v644
  %v646 = vpop.xlane.xlu0 %645
  %v647 = vsel %vm456, %v577, 0.0
  %648 = vadd.xlane.f32.xlu0 %v647
  %v649 = vpop.xlane.xlu0 %648
  %v650 = vmul.f32 %v580, %v529
  %v651 = vmul.f32 %v583, %v529
  %v652 = vmul.f32 %v586, %v529
  %v653 = vmul.f32 %v589, %v529
  %v654 = vmul.f32 %v592, %v529
  %v655 = vmul.f32 %v595, %v529
  %v656 = vmul.f32 %v598, %v529
  %v657 = vmul.f32 %v601, %v529
  %v658 = vmul.f32 %v604, %v529
  %v659 = vmul.f32 %v607, %v529
  %v660 = vmul.f32 %v610, %v529
  %v661 = vmul.f32 %v613, %v529
  %v662 = vmul.f32 %v616, %v529
  %v663 = vmul.f32 %v619, %v529
  %v664 = vmul.f32 %v622, %v529
  %v665 = vmul.f32 %v625, %v529
  %v666 = vmul.f32 %v628, %v529
  %v667 = vmul.f32 %v631, %v529
  %v668 = vmul.f32 %v634, %v529
  %v669 = vmul.f32 %v637, %v529
  %v670 = vmul.f32 %v640, %v529
  %v671 = vmul.f32 %v643, %v529
  %v672 = vmul.f32 %v646, %v529
  %v673 = vmul.f32 %v649, %v529
  %v674 = vsub.f32 %v432, %v530
  %v675 = vsub.f32 %v433, %v531
  %v676 = vsub.f32 %v434, %v532
  %v677 = vsub.f32 %v435, %v533
  %v678 = vsub.f32 %v436, %v534
  %v679 = vsub.f32 %v437, %v535
  %v680 = vsub.f32 %v438, %v536
  %v681 = vsub.f32 %v439, %v537
  %v682 = vsub.f32 %v440, %v538
  %v683 = vsub.f32 %v441, %v539
  %v684 = vsub.f32 %v442, %v540
  %v685 = vsub.f32 %v443, %v541
  %v686 = vsub.f32 %v444, %v542
  %v687 = vsub.f32 %v445, %v543
  %v688 = vsub.f32 %v446, %v544
  %v689 = vsub.f32 %v447, %v545
  %v690 = vsub.f32 %v448, %v546
  %v691 = vsub.f32 %v449, %v547
  %v692 = vsub.f32 %v450, %v548
  %v693 = vsub.f32 %v451, %v549
  %v694 = vsub.f32 %v452, %v550
  %v695 = vsub.f32 %v453, %v551
  %v696 = vsub.f32 %v454, %v552
  %v697 = vsub.f32 %v455, %v553
  %v698 = vmul.f32 %v530, %v530
  %v699 = vmul.f32 %v531, %v531
  %v700 = vmul.f32 %v532, %v532
  %v701 = vmul.f32 %v533, %v533
  %v702 = vmul.f32 %v534, %v534
  %v703 = vmul.f32 %v535, %v535
  %v704 = vmul.f32 %v536, %v536
  %v705 = vmul.f32 %v537, %v537
  %v706 = vmul.f32 %v538, %v538
  %v707 = vmul.f32 %v539, %v539
  %v708 = vmul.f32 %v540, %v540
  %v709 = vmul.f32 %v541, %v541
  %v710 = vmul.f32 %v542, %v542
  %v711 = vmul.f32 %v543, %v543
  %v712 = vmul.f32 %v544, %v544
  %v713 = vmul.f32 %v545, %v545
  %v714 = vmul.f32 %v546, %v546
  %v715 = vmul.f32 %v547, %v547
  %v716 = vmul.f32 %v548, %v548
  %v717 = vmul.f32 %v549, %v549
  %v718 = vmul.f32 %v550, %v550
  %v719 = vmul.f32 %v551, %v551
  %v720 = vmul.f32 %v552, %v552
  %v721 = vmul.f32 %v553, %v553
  %v722 = vsub.f32 %v650, %v698
  %v723 = vsub.f32 %v651, %v699
  %v724 = vsub.f32 %v652, %v700
  %v725 = vsub.f32 %v653, %v701
  %v726 = vsub.f32 %v654, %v702
  %v727 = vsub.f32 %v655, %v703
  %v728 = vsub.f32 %v656, %v704
  %v729 = vsub.f32 %v657, %v705
  %v730 = vsub.f32 %v658, %v706
  %v731 = vsub.f32 %v659, %v707
  %v732 = vsub.f32 %v660, %v708
  %v733 = vsub.f32 %v661, %v709
  %v734 = vsub.f32 %v662, %v710
  %v735 = vsub.f32 %v663, %v711
  %v736 = vsub.f32 %v664, %v712
  %v737 = vsub.f32 %v665, %v713
  %v738 = vsub.f32 %v666, %v714
  %v739 = vsub.f32 %v667, %v715
  %v740 = vsub.f32 %v668, %v716
  %v741 = vsub.f32 %v669, %v717
  %v742 = vsub.f32 %v670, %v718
  %v743 = vsub.f32 %v671, %v719
  %v744 = vsub.f32 %v672, %v720
  %v745 = vsub.f32 %v673, %v721
  %v746 = vadd.f32 %v722, 1e-05
  %v747 = vadd.f32 %v723, 1e-05
  %v748 = vadd.f32 %v724, 1e-05
  %v749 = vadd.f32 %v725, 1e-05
  %v750 = vadd.f32 %v726, 1e-05
  %v751 = vadd.f32 %v727, 1e-05
  %v752 = vadd.f32 %v728, 1e-05
  %v753 = vadd.f32 %v729, 1e-05
  %v754 = vadd.f32 %v730, 1e-05
  %v755 = vadd.f32 %v731, 1e-05
  %v756 = vadd.f32 %v732, 1e-05
  %v757 = vadd.f32 %v733, 1e-05
  %v758 = vadd.f32 %v734, 1e-05
  %v759 = vadd.f32 %v735, 1e-05
  %v760 = vadd.f32 %v736, 1e-05
  %v761 = vadd.f32 %v737, 1e-05
  %v762 = vadd.f32 %v738, 1e-05
  %v763 = vadd.f32 %v739, 1e-05
  %v764 = vadd.f32 %v740, 1e-05
  %v765 = vadd.f32 %v741, 1e-05
  %v766 = vadd.f32 %v742, 1e-05
  %v767 = vadd.f32 %v743, 1e-05
  %v768 = vadd.f32 %v744, 1e-05
  %v769 = vadd.f32 %v745, 1e-05
  %v770 = vrsqrt.pop %v746
  %v771 = vrsqrt.pop %v747
  %v772 = vrsqrt.pop %v748
  %v773 = vrsqrt.pop %v749
  %v774 = vrsqrt.pop %v750
  %v775 = vrsqrt.pop %v751
  %v776 = vrsqrt.pop %v752
  %v777 = vrsqrt.pop %v753
  %v778 = vrsqrt.pop %v754
  %v779 = vrsqrt.pop %v755
  %v780 = vrsqrt.pop %v756
  %v781 = vrsqrt.pop %v757
  %v782 = vrsqrt.pop %v758
  %v783 = vrsqrt.pop %v759
  %v784 = vrsqrt.pop %v760
  %v785 = vrsqrt.pop %v761
  %v786 = vrsqrt.pop %v762
  %v787 = vrsqrt.pop %v763
  %v788 = vrsqrt.pop %v764
  %v789 = vrsqrt.pop %v765
  %v790 = vrsqrt.pop %v766
  %v791 = vrsqrt.pop %v767
  %v792 = vrsqrt.pop %v768
  %v793 = vrsqrt.pop %v769
  %v794 = vmul.f32 %v674, %v770
  %v795 = vmul.f32 %v675, %v771
  %v796 = vmul.f32 %v676, %v772
  %v797 = vmul.f32 %v677, %v773
  %v798 = vmul.f32 %v678, %v774
  %v799 = vmul.f32 %v679, %v775
  %v800 = vmul.f32 %v680, %v776
  %v801 = vmul.f32 %v681, %v777
  %v802 = vmul.f32 %v682, %v778
  %v803 = vmul.f32 %v683, %v779
  %v804 = vmul.f32 %v684, %v780
  %v805 = vmul.f32 %v685, %v781
  %v806 = vmul.f32 %v686, %v782
  %v807 = vmul.f32 %v687, %v783
  %v808 = vmul.f32 %v688, %v784
  %v809 = vmul.f32 %v689, %v785
  %v810 = vmul.f32 %v690, %v786
  %v811 = vmul.f32 %v691, %v787
  %v812 = vmul.f32 %v692, %v788
  %v813 = vmul.f32 %v693, %v789
  %v814 = vmul.f32 %v694, %v790
  %v815 = vmul.f32 %v695, %v791
  %v816 = vmul.f32 %v696, %v792
  %v817 = vmul.f32 %v697, %v793
  %v818 = vpack.c.bf16 %v795, %v794
  %v819 = vpack.c.bf16 %v797, %v796
  %v820 = vpack.c.bf16 %v799, %v798
  %v821 = vpack.c.bf16 %v801, %v800
  %v822 = vpack.c.bf16 %v803, %v802
  %v823 = vpack.c.bf16 %v805, %v804
  %v824 = vpack.c.bf16 %v807, %v806
  %v825 = vpack.c.bf16 %v809, %v808
  %v826 = vpack.c.bf16 %v811, %v810
  %v827 = vpack.c.bf16 %v813, %v812
  %v828 = vpack.c.bf16 %v815, %v814
  %v829 = vpack.c.bf16 %v817, %v816
  %v830 = vpack.c.bf16 %v40, %v39
  %v831 = vpack.c.bf16 %v42, %v41
  %v832 = vlaneseq
  %v833 = vshrl.u32 %v832, 7
  %v834 = vsub.s32 0, %v833
  %v835 = vrot.slane %v43, %v834
  %v837 = vsel %vm456, %v818, 0
  %v840 = vsel %vm456, %v819, 0
  %v843 = vsel %vm456, %v820, 0
  %v846 = vsel %vm456, %v821, 0
  %v849 = vsel %vm456, %v822, 0
  %v852 = vsel %vm456, %v823, 0
  %v855 = vsel %vm456, %v824, 0
  %v858 = vsel %vm456, %v825, 0
  %v861 = vsel %vm456, %v826, 0
  %v864 = vsel %vm456, %v827, 0
  %v867 = vsel %vm456, %v828, 0
  %v870 = vsel %vm456, %v829, 0
  %872 = vmatprep.subr.bf16.mxu0 0
  %873 = vmatpush1.bf16.msra.mxu0 0
  %874 = vmatprep.subr.bf16.mxu0 0
  %875 = vmatpush1.bf16.msra.mxu0 0
  %876 = vmatprep.subr.bf16.mxu0 0
  %877 = vmatpush1.bf16.msra.mxu0 0
  %878 = vmatprep.subr.bf16.mxu0 0
  %879 = vmatpush1.bf16.msra.mxu0 0
  %880 = vmatprep.subr.bf16.mxu0 0
  %881 = vmatpush1.bf16.msra.mxu0 0
  %882 = vmatprep.subr.bf16.mxu0 0
  %883 = vmatpush1.bf16.msra.mxu0 0
  %884 = vmatprep.subr.bf16.mxu0 0
  %885 = vmatpush1.bf16.msra.mxu0 %v831
  %886 = vmatprep.subr.bf16.mxu0 0
  %887 = vmatpush1.bf16.msra.mxu0 %v830
  %888 = vmatprep.subr.bf16.mxu0 0
  %889 = vmatpush2.bf16.msra.mxu0 0
  %890 = vmatprep.subr.bf16.mxu0 0
  %891 = vmatpush2.bf16.msra.mxu0 0
  %892 = vmatprep.subr.bf16.mxu0 0
  %893 = vmatpush2.bf16.msra.mxu0 0
  %894 = vmatprep.subr.bf16.mxu0 0
  %895 = vmatpush2.bf16.msra.mxu0 0
  %896 = vmatprep.subr.bf16.mxu0 0
  %897 = vmatpush2.bf16.msra.mxu0 0
  %898 = vmatprep.subr.bf16.mxu0 0
  %899 = vmatpush2.bf16.msra.mxu0 0
  %900 = vmatprep.subr.bf16.mxu0 0
  %901 = vmatpush2.bf16.msra.mxu0 0
  %902 = vmatprep.subr.bf16.mxu0 0
  %903 = vmatpush2.bf16.msra.mxu0 0
  %904 = vmatprep.mubr.bf16.mxu0 0
  %905 = vmatmul.mubr.bf16.gmra.mxu0 %v837
  %v906 = vpop.f32.mrf.mxu0
  %v907 = vadd.f32 %v835, %v906
  %v908 = vpop.f32.mrf.mxu0
  %v909 = vpop.f32.mrf.mxu0
  %v910 = vadd.f32 %v835, %v909
  %v911 = vpop.f32.mrf.mxu0
  %912 = vmatprep.mubr.bf16.mxu0 0
  %913 = vmatmul.mubr.bf16.gmra.mxu0 %v840
  %v914 = vpop.f32.mrf.mxu0
  %v915 = vadd.f32 %v835, %v914
  %v916 = vpop.f32.mrf.mxu0
  %v917 = vpop.f32.mrf.mxu0
  %v918 = vadd.f32 %v835, %v917
  %v919 = vpop.f32.mrf.mxu0
  %920 = vmatprep.mubr.bf16.mxu0 0
  %921 = vmatmul.mubr.bf16.gmra.mxu0 %v843
  %v922 = vpop.f32.mrf.mxu0
  %v923 = vadd.f32 %v835, %v922
  %v924 = vpop.f32.mrf.mxu0
  %v925 = vpop.f32.mrf.mxu0
  %v926 = vadd.f32 %v835, %v925
  %v927 = vpop.f32.mrf.mxu0
  %928 = vmatprep.mubr.bf16.mxu0 0
  %929 = vmatmul.mubr.bf16.gmra.mxu0 %v846
  %v930 = vpop.f32.mrf.mxu0
  %v931 = vadd.f32 %v835, %v930
  %v932 = vpop.f32.mrf.mxu0
  %v933 = vpop.f32.mrf.mxu0
  %v934 = vadd.f32 %v835, %v933
  %v935 = vpop.f32.mrf.mxu0
  %936 = vmatprep.mubr.bf16.mxu0 0
  %937 = vmatmul.mubr.bf16.gmra.mxu0 %v849
  %v938 = vpop.f32.mrf.mxu0
  %v939 = vadd.f32 %v835, %v938
  %v940 = vpop.f32.mrf.mxu0
  %v941 = vpop.f32.mrf.mxu0
  %v942 = vadd.f32 %v835, %v941
  %v943 = vpop.f32.mrf.mxu0
  %944 = vmatprep.mubr.bf16.mxu0 0
  %945 = vmatmul.mubr.bf16.gmra.mxu0 %v852
  %v946 = vpop.f32.mrf.mxu0
  %v947 = vadd.f32 %v835, %v946
  %v948 = vpop.f32.mrf.mxu0
  %v949 = vpop.f32.mrf.mxu0
  %v950 = vadd.f32 %v835, %v949
  %v951 = vpop.f32.mrf.mxu0
  %952 = vmatprep.mubr.bf16.mxu0 0
  %953 = vmatmul.mubr.bf16.gmra.mxu0 %v855
  %v954 = vpop.f32.mrf.mxu0
  %v955 = vadd.f32 %v835, %v954
  %v956 = vpop.f32.mrf.mxu0
  %v957 = vpop.f32.mrf.mxu0
  %v958 = vadd.f32 %v835, %v957
  %v959 = vpop.f32.mrf.mxu0
  %960 = vmatprep.mubr.bf16.mxu0 0
  %961 = vmatmul.mubr.bf16.gmra.mxu0 %v858
  %v962 = vpop.f32.mrf.mxu0
  %v963 = vadd.f32 %v835, %v962
  %v964 = vpop.f32.mrf.mxu0
  %v965 = vpop.f32.mrf.mxu0
  %v966 = vadd.f32 %v835, %v965
  %v967 = vpop.f32.mrf.mxu0
  %968 = vmatprep.mubr.bf16.mxu0 0
  %969 = vmatmul.mubr.bf16.gmra.mxu0 %v861
  %v970 = vpop.f32.mrf.mxu0
  %v971 = vadd.f32 %v835, %v970
  %v972 = vpop.f32.mrf.mxu0
  %v973 = vpop.f32.mrf.mxu0
  %v974 = vadd.f32 %v835, %v973
  %v975 = vpop.f32.mrf.mxu0
  %976 = vmatprep.mubr.bf16.mxu0 0
  %977 = vmatmul.mubr.bf16.gmra.mxu0 %v864
  %v978 = vpop.f32.mrf.mxu0
  %v979 = vadd.f32 %v835, %v978
  %v980 = vpop.f32.mrf.mxu0
  %v981 = vpop.f32.mrf.mxu0
  %v982 = vadd.f32 %v835, %v981
  %v983 = vpop.f32.mrf.mxu0
  %984 = vmatprep.mubr.bf16.mxu0 0
  %985 = vmatmul.mubr.bf16.gmra.mxu0 %v867
  %v986 = vpop.f32.mrf.mxu0
  %v987 = vadd.f32 %v835, %v986
  %v988 = vpop.f32.mrf.mxu0
  %v989 = vpop.f32.mrf.mxu0
  %v990 = vadd.f32 %v835, %v989
  %v991 = vpop.f32.mrf.mxu0
  %992 = vmatprep.mubr.bf16.mxu0 0
  %993 = vmatmul.mubr.bf16.gmra.mxu0 %v870
  %v994 = vpop.f32.mrf.mxu0
  %v995 = vadd.f32 %v835, %v994
  %v996 = vpop.f32.mrf.mxu0
  %v997 = vpop.f32.mrf.mxu0
  %v998 = vadd.f32 %v835, %v997
  %v999 = vpop.f32.mrf.mxu0
  %1000 = vdwg.mxu0
  %v1001 = vpack.c.bf16 %v910, %v907
  %v1002 = vpack.c.bf16 %v918, %v915
  %v1003 = vpack.c.bf16 %v926, %v923
  %v1004 = vpack.c.bf16 %v934, %v931
  %v1005 = vpack.c.bf16 %v942, %v939
  %v1006 = vpack.c.bf16 %v950, %v947
  %v1007 = vpack.c.bf16 %v45, %v44
  %v1008 = vpack.c.bf16 %v47, %v46
  %v1010 = vsel %vm456, %v1001, 0
  %v1013 = vsel %vm456, %v1002, 0
  %v1016 = vsel %vm456, %v1003, 0
  %v1019 = vsel %vm456, %v1004, 0
  %v1022 = vsel %vm456, %v1005, 0
  %v1025 = vsel %vm456, %v1006, 0
  %1027 = vmatprep.subr.bf16.mxu0 0
  %1028 = vmatpush1.bf16.msra.mxu0 0
  %1029 = vmatprep.subr.bf16.mxu0 0
  %1030 = vmatpush1.bf16.msra.mxu0 0
  %1031 = vmatprep.subr.bf16.mxu0 0
  %1032 = vmatpush1.bf16.msra.mxu0 0
  %1033 = vmatprep.subr.bf16.mxu0 0
  %1034 = vmatpush1.bf16.msra.mxu0 0
  %1035 = vmatprep.subr.bf16.mxu0 0
  %1036 = vmatpush1.bf16.msra.mxu0 0
  %1037 = vmatprep.subr.bf16.mxu0 0
  %1038 = vmatpush1.bf16.msra.mxu0 0
  %1039 = vmatprep.subr.bf16.mxu0 0
  %1040 = vmatpush1.bf16.msra.mxu0 %v1008
  %1041 = vmatprep.subr.bf16.mxu0 0
  %1042 = vmatpush1.bf16.msra.mxu0 %v1007
  %1043 = vmatprep.subr.bf16.mxu0 0
  %1044 = vmatpush2.bf16.msra.mxu0 0
  %1045 = vmatprep.subr.bf16.mxu0 0
  %1046 = vmatpush2.bf16.msra.mxu0 0
  %1047 = vmatprep.subr.bf16.mxu0 0
  %1048 = vmatpush2.bf16.msra.mxu0 0
  %1049 = vmatprep.subr.bf16.mxu0 0
  %1050 = vmatpush2.bf16.msra.mxu0 0
  %1051 = vmatprep.subr.bf16.mxu0 0
  %1052 = vmatpush2.bf16.msra.mxu0 0
  %1053 = vmatprep.subr.bf16.mxu0 0
  %1054 = vmatpush2.bf16.msra.mxu0 0
  %1055 = vmatprep.subr.bf16.mxu0 0
  %1056 = vmatpush2.bf16.msra.mxu0 0
  %1057 = vmatprep.subr.bf16.mxu0 0
  %1058 = vmatpush2.bf16.msra.mxu0 0
  %1059 = vmatprep.mubr.bf16.mxu0 0
  %1060 = vmatmul.mubr.bf16.gmra.mxu0 %v1010
  %v1061 = vpop.f32.mrf.mxu0
  %v1062 = vadd.f32 0.0, %v1061
  %v1063 = vpop.f32.mrf.mxu0
  %v1064 = vpop.f32.mrf.mxu0
  %v1065 = vadd.f32 0.0, %v1064
  %v1066 = vpop.f32.mrf.mxu0
  %1067 = vmatprep.mubr.bf16.mxu0 0
  %1068 = vmatmul.mubr.bf16.gmra.mxu0 %v1013
  %v1069 = vpop.f32.mrf.mxu0
  %v1070 = vadd.f32 0.0, %v1069
  %v1071 = vpop.f32.mrf.mxu0
  %v1072 = vpop.f32.mrf.mxu0
  %v1073 = vadd.f32 0.0, %v1072
  %v1074 = vpop.f32.mrf.mxu0
  %1075 = vmatprep.mubr.bf16.mxu0 0
  %1076 = vmatmul.mubr.bf16.gmra.mxu0 %v1016
  %v1077 = vpop.f32.mrf.mxu0
  %v1078 = vadd.f32 0.0, %v1077
  %v1079 = vpop.f32.mrf.mxu0
  %v1080 = vpop.f32.mrf.mxu0
  %v1081 = vadd.f32 0.0, %v1080
  %v1082 = vpop.f32.mrf.mxu0
  %1083 = vmatprep.mubr.bf16.mxu0 0
  %1084 = vmatmul.mubr.bf16.gmra.mxu0 %v1019
  %v1085 = vpop.f32.mrf.mxu0
  %v1086 = vadd.f32 0.0, %v1085
  %v1087 = vpop.f32.mrf.mxu0
  %v1088 = vpop.f32.mrf.mxu0
  %v1089 = vadd.f32 0.0, %v1088
  %v1090 = vpop.f32.mrf.mxu0
  %1091 = vmatprep.mubr.bf16.mxu0 0
  %1092 = vmatmul.mubr.bf16.gmra.mxu0 %v1022
  %v1093 = vpop.f32.mrf.mxu0
  %v1094 = vadd.f32 0.0, %v1093
  %v1095 = vpop.f32.mrf.mxu0
  %v1096 = vpop.f32.mrf.mxu0
  %v1097 = vadd.f32 0.0, %v1096
  %v1098 = vpop.f32.mrf.mxu0
  %1099 = vmatprep.mubr.bf16.mxu0 0
  %1100 = vmatmul.mubr.bf16.gmra.mxu0 %v1025
  %v1101 = vpop.f32.mrf.mxu0
  %v1102 = vadd.f32 0.0, %v1101
  %v1103 = vpop.f32.mrf.mxu0
  %v1104 = vpop.f32.mrf.mxu0
  %v1105 = vadd.f32 0.0, %v1104
  %v1106 = vpop.f32.mrf.mxu0
  %1107 = vdwg.mxu0
  %v1108 = vpack.c.bf16 %v1065, %v1062
  %v1109 = vpack.c.bf16 %v1073, %v1070
  %v1110 = vpack.c.bf16 %v1081, %v1078
  %v1111 = vpack.c.bf16 %v1089, %v1086
  %v1112 = vpack.c.bf16 %v1097, %v1094
  %v1113 = vpack.c.bf16 %v1105, %v1102
  %v1115 = vsel %vm456, %v1108, 0
  %v1118 = vsel %vm456, %v1109, 0
  %v1121 = vsel %vm456, %v1110, 0
  %v1124 = vsel %vm456, %v1111, 0
  %v1127 = vsel %vm456, %v1112, 0
  %v1130 = vsel %vm456, %v1113, 0
  %1132 = vmatprep.subr.bf16.mxu0 0
  %1133 = vmatpush1.bf16.xpose.msra.mxu0 0
  %1134 = vmatprep.subr.bf16.mxu0 0
  %1135 = vmatpush1.bf16.xpose.msra.mxu0 0
  %1136 = vmatprep.subr.bf16.mxu0 0
  %1137 = vmatpush1.bf16.xpose.msra.mxu0 %v1025
  %1138 = vmatprep.subr.bf16.mxu0 0
  %1139 = vmatpush1.bf16.xpose.msra.mxu0 %v1022
  %1140 = vmatprep.subr.bf16.mxu0 0
  %1141 = vmatpush1.bf16.xpose.msra.mxu0 %v1019
  %1142 = vmatprep.subr.bf16.mxu0 0
  %1143 = vmatpush1.bf16.xpose.msra.mxu0 %v1016
  %1144 = vmatprep.subr.bf16.mxu0 0
  %1145 = vmatpush1.bf16.xpose.msra.mxu0 %v1013
  %1146 = vmatprep.subr.bf16.mxu0 0
  %1147 = vmatpush1.bf16.xpose.msra.mxu0 %v1010
  %1148 = vmatprep.subr.bf16.mxu0 0
  %1149 = vmatpush2.bf16.xpose.msra.mxu0 0
  %1150 = vmatprep.subr.bf16.mxu0 0
  %1151 = vmatpush2.bf16.xpose.msra.mxu0 0
  %1152 = vmatprep.subr.bf16.mxu0 0
  %1153 = vmatpush2.bf16.xpose.msra.mxu0 0
  %1154 = vmatprep.subr.bf16.mxu0 0
  %1155 = vmatpush2.bf16.xpose.msra.mxu0 0
  %1156 = vmatprep.subr.bf16.mxu0 0
  %1157 = vmatpush2.bf16.xpose.msra.mxu0 0
  %1158 = vmatprep.subr.bf16.mxu0 0
  %1159 = vmatpush2.bf16.xpose.msra.mxu0 0
  %1160 = vmatprep.subr.bf16.mxu0 0
  %1161 = vmatpush2.bf16.xpose.msra.mxu0 0
  %1162 = vmatprep.subr.bf16.mxu0 0
  %1163 = vmatpush2.bf16.xpose.msra.mxu0 0
  %1164 = vmatprep.mubr.bf16.mxu0 0
  %1165 = vmatmul.mubr.bf16.gmra.mxu0 %v1115
  %v1166 = vpop.f32.mrf.mxu0
  %v1167 = vadd.f32 0.0, %v1166
  %v1168 = vpop.f32.mrf.mxu0
  %v1169 = vpop.f32.mrf.mxu0
  %v1170 = vadd.f32 0.0, %v1169
  %v1171 = vpop.f32.mrf.mxu0
  %1172 = vmatprep.mubr.bf16.mxu0 0
  %1173 = vmatmul.mubr.bf16.gmra.mxu0 %v1118
  %v1174 = vpop.f32.mrf.mxu0
  %v1175 = vadd.f32 0.0, %v1174
  %v1176 = vpop.f32.mrf.mxu0
  %v1177 = vpop.f32.mrf.mxu0
  %v1178 = vadd.f32 0.0, %v1177
  %v1179 = vpop.f32.mrf.mxu0
  %1180 = vmatprep.mubr.bf16.mxu0 0
  %1181 = vmatmul.mubr.bf16.gmra.mxu0 %v1121
  %v1182 = vpop.f32.mrf.mxu0
  %v1183 = vadd.f32 0.0, %v1182
  %v1184 = vpop.f32.mrf.mxu0
  %v1185 = vpop.f32.mrf.mxu0
  %v1186 = vadd.f32 0.0, %v1185
  %v1187 = vpop.f32.mrf.mxu0
  %1188 = vmatprep.mubr.bf16.mxu0 0
  %1189 = vmatmul.mubr.bf16.gmra.mxu0 %v1124
  %v1190 = vpop.f32.mrf.mxu0
  %v1191 = vadd.f32 0.0, %v1190
  %v1192 = vpop.f32.mrf.mxu0
  %v1193 = vpop.f32.mrf.mxu0
  %v1194 = vadd.f32 0.0, %v1193
  %v1195 = vpop.f32.mrf.mxu0
  %1196 = vmatprep.mubr.bf16.mxu0 0
  %1197 = vmatmul.mubr.bf16.gmra.mxu0 %v1127
  %v1198 = vpop.f32.mrf.mxu0
  %v1199 = vadd.f32 0.0, %v1198
  %v1200 = vpop.f32.mrf.mxu0
  %v1201 = vpop.f32.mrf.mxu0
  %v1202 = vadd.f32 0.0, %v1201
  %v1203 = vpop.f32.mrf.mxu0
  %1204 = vmatprep.mubr.bf16.mxu0 0
  %1205 = vmatmul.mubr.bf16.gmra.mxu0 %v1130
  %v1206 = vpop.f32.mrf.mxu0
  %v1207 = vadd.f32 0.0, %v1206
  %v1208 = vpop.f32.mrf.mxu0
  %v1209 = vpop.f32.mrf.mxu0
  %v1210 = vadd.f32 0.0, %v1209
  %v1211 = vpop.f32.mrf.mxu0
  %1212 = vdwg.mxu0
  %vm1213 = vcmask 785408
  %v1214 = vsel %vm1213, %v1167, -inf
  %1215 = vmax.xlane.f32.xlu0 %v1214
  %v1216 = vpop.xlane.xlu0 %1215
  %v1217 = vsel %vm1213, %v1170, -inf
  %1218 = vmax.xlane.f32.xlu0 %v1217
  %v1219 = vpop.xlane.xlu0 %1218
  %v1220 = vsel %vm1213, %v1175, -inf
  %1221 = vmax.xlane.f32.xlu0 %v1220
  %v1222 = vpop.xlane.xlu0 %1221
  %v1223 = vsel %vm1213, %v1178, -inf
  %1224 = vmax.xlane.f32.xlu0 %v1223
  %v1225 = vpop.xlane.xlu0 %1224
  %v1226 = vsel %vm1213, %v1183, -inf
  %1227 = vmax.xlane.f32.xlu0 %v1226
  %v1228 = vpop.xlane.xlu0 %1227
  %v1229 = vsel %vm1213, %v1186, -inf
  %1230 = vmax.xlane.f32.xlu0 %v1229
  %v1231 = vpop.xlane.xlu0 %1230
  %v1232 = vsel %vm1213, %v1191, -inf
  %1233 = vmax.xlane.f32.xlu0 %v1232
  %v1234 = vpop.xlane.xlu0 %1233
  %v1235 = vsel %vm1213, %v1194, -inf
  %1236 = vmax.xlane.f32.xlu0 %v1235
  %v1237 = vpop.xlane.xlu0 %1236
  %v1238 = vsel %vm1213, %v1199, -inf
  %1239 = vmax.xlane.f32.xlu0 %v1238
  %v1240 = vpop.xlane.xlu0 %1239
  %v1241 = vsel %vm1213, %v1202, -inf
  %1242 = vmax.xlane.f32.xlu0 %v1241
  %v1243 = vpop.xlane.xlu0 %1242
  %v1244 = vsel %vm1213, %v1207, -inf
  %1245 = vmax.xlane.f32.xlu0 %v1244
  %v1246 = vpop.xlane.xlu0 %1245
  %v1247 = vsel %vm1213, %v1210, -inf
  %1248 = vmax.xlane.f32.xlu0 %v1247
  %v1249 = vpop.xlane.xlu0 %1248
  %v1250 = vsub.f32 %v1167, %v1216
  %v1251 = vsub.f32 %v1170, %v1219
  %v1252 = vsub.f32 %v1175, %v1222
  %v1253 = vsub.f32 %v1178, %v1225
  %v1254 = vsub.f32 %v1183, %v1228
  %v1255 = vsub.f32 %v1186, %v1231
  %v1256 = vsub.f32 %v1191, %v1234
  %v1257 = vsub.f32 %v1194, %v1237
  %v1258 = vsub.f32 %v1199, %v1240
  %v1259 = vsub.f32 %v1202, %v1243
  %v1260 = vsub.f32 %v1207, %v1246
  %v1261 = vsub.f32 %v1210, %v1249
  %v1262 = vmul.f32 %v1250, 1.442695
  %v1263 = vpow.pop %v1262
  %v1264 = vmul.f32 %v1251, 1.442695
  %v1265 = vpow.pop %v1264
  %v1266 = vmul.f32 %v1252, 1.442695
  %v1267 = vpow.pop %v1266
  %v1268 = vmul.f32 %v1253, 1.442695
  %v1269 = vpow.pop %v1268
  %v1270 = vmul.f32 %v1254, 1.442695
  %v1271 = vpow.pop %v1270
  %v1272 = vmul.f32 %v1255, 1.442695
  %v1273 = vpow.pop %v1272
  %v1274 = vmul.f32 %v1256, 1.442695
  %v1275 = vpow.pop %v1274
  %v1276 = vmul.f32 %v1257, 1.442695
  %v1277 = vpow.pop %v1276
  %v1278 = vmul.f32 %v1258, 1.442695
  %v1279 = vpow.pop %v1278
  %v1280 = vmul.f32 %v1259, 1.442695
  %v1281 = vpow.pop %v1280
  %v1282 = vmul.f32 %v1260, 1.442695
  %v1283 = vpow.pop %v1282
  %v1284 = vmul.f32 %v1261, 1.442695
  %v1285 = vpow.pop %v1284
  %v1286 = vsel %vm1213, %v1263, 0.0
  %1287 = vadd.xlane.f32.xlu0 %v1286
  %v1288 = vpop.xlane.xlu0 %1287
  %v1289 = vsel %vm1213, %v1265, 0.0
  %1290 = vadd.xlane.f32.xlu0 %v1289
  %v1291 = vpop.xlane.xlu0 %1290
  %v1292 = vsel %vm1213, %v1267, 0.0
  %1293 = vadd.xlane.f32.xlu0 %v1292
  %v1294 = vpop.xlane.xlu0 %1293
  %v1295 = vsel %vm1213, %v1269, 0.0
  %1296 = vadd.xlane.f32.xlu0 %v1295
  %v1297 = vpop.xlane.xlu0 %1296
  %v1298 = vsel %vm1213, %v1271, 0.0
  %1299 = vadd.xlane.f32.xlu0 %v1298
  %v1300 = vpop.xlane.xlu0 %1299
  %v1301 = vsel %vm1213, %v1273, 0.0
  %1302 = vadd.xlane.f32.xlu0 %v1301
  %v1303 = vpop.xlane.xlu0 %1302
  %v1304 = vsel %vm1213, %v1275, 0.0
  %1305 = vadd.xlane.f32.xlu0 %v1304
  %v1306 = vpop.xlane.xlu0 %1305
  %v1307 = vsel %vm1213, %v1277, 0.0
  %1308 = vadd.xlane.f32.xlu0 %v1307
  %v1309 = vpop.xlane.xlu0 %1308
  %v1310 = vsel %vm1213, %v1279, 0.0
  %1311 = vadd.xlane.f32.xlu0 %v1310
  %v1312 = vpop.xlane.xlu0 %1311
  %v1313 = vsel %vm1213, %v1281, 0.0
  %1314 = vadd.xlane.f32.xlu0 %v1313
  %v1315 = vpop.xlane.xlu0 %1314
  %v1316 = vsel %vm1213, %v1283, 0.0
  %1317 = vadd.xlane.f32.xlu0 %v1316
  %v1318 = vpop.xlane.xlu0 %1317
  %v1319 = vsel %vm1213, %v1285, 0.0
  %1320 = vadd.xlane.f32.xlu0 %v1319
  %v1321 = vpop.xlane.xlu0 %1320
  %v1322 = vrcp.pop %v1288
  %v1323 = vrcp.pop %v1291
  %v1324 = vrcp.pop %v1294
  %v1325 = vrcp.pop %v1297
  %v1326 = vrcp.pop %v1300
  %v1327 = vrcp.pop %v1303
  %v1328 = vrcp.pop %v1306
  %v1329 = vrcp.pop %v1309
  %v1330 = vrcp.pop %v1312
  %v1331 = vrcp.pop %v1315
  %v1332 = vrcp.pop %v1318
  %v1333 = vrcp.pop %v1321
  %v1334 = vmul.f32 %v1263, %v1322
  %v1335 = vmul.f32 %v1265, %v1323
  %v1336 = vmul.f32 %v1267, %v1324
  %v1337 = vmul.f32 %v1269, %v1325
  %v1338 = vmul.f32 %v1271, %v1326
  %v1339 = vmul.f32 %v1273, %v1327
  %v1340 = vmul.f32 %v1275, %v1328
  %v1341 = vmul.f32 %v1277, %v1329
  %v1342 = vmul.f32 %v1279, %v1330
  %v1343 = vmul.f32 %v1281, %v1331
  %v1344 = vmul.f32 %v1283, %v1332
  %v1345 = vmul.f32 %v1285, %v1333
  %v1346 = vpack.c.bf16 %v1335, %v1334
  %v1347 = vpack.c.bf16 %v1337, %v1336
  %v1348 = vpack.c.bf16 %v1339, %v1338
  %v1349 = vpack.c.bf16 %v1341, %v1340
  %v1350 = vpack.c.bf16 %v1343, %v1342
  %v1351 = vpack.c.bf16 %v1345, %v1344
  %v1353 = vsel %vm1213, %v1346, 0
  %v1356 = vsel %vm1213, %v1347, 0
  %v1359 = vsel %vm1213, %v1348, 0
  %v1362 = vsel %vm1213, %v1349, 0
  %v1365 = vsel %vm1213, %v1350, 0
  %v1368 = vsel %vm1213, %v1351, 0
  %1370 = vmatprep.subr.bf16.mxu0 0
  %1371 = vmatpush1.bf16.msra.mxu0 0
  %1372 = vmatprep.subr.bf16.mxu0 0
  %1373 = vmatpush1.bf16.msra.mxu0 0
  %1374 = vmatprep.subr.bf16.mxu0 0
  %1375 = vmatpush1.bf16.msra.mxu0 %v1006
  %1376 = vmatprep.subr.bf16.mxu0 0
  %1377 = vmatpush1.bf16.msra.mxu0 %v1005
  %1378 = vmatprep.subr.bf16.mxu0 0
  %1379 = vmatpush1.bf16.msra.mxu0 %v1004
  %1380 = vmatprep.subr.bf16.mxu0 0
  %1381 = vmatpush1.bf16.msra.mxu0 %v1003
  %1382 = vmatprep.subr.bf16.mxu0 0
  %1383 = vmatpush1.bf16.msra.mxu0 %v1002
  %1384 = vmatprep.subr.bf16.mxu0 0
  %1385 = vmatpush1.bf16.msra.mxu0 %v1001
  %1386 = vmatprep.subr.bf16.mxu0 0
  %1387 = vmatpush2.bf16.msra.mxu0 0
  %1388 = vmatprep.subr.bf16.mxu0 0
  %1389 = vmatpush2.bf16.msra.mxu0 0
  %1390 = vmatprep.subr.bf16.mxu0 0
  %1391 = vmatpush2.bf16.msra.mxu0 0
  %1392 = vmatprep.subr.bf16.mxu0 0
  %1393 = vmatpush2.bf16.msra.mxu0 0
  %1394 = vmatprep.subr.bf16.mxu0 0
  %1395 = vmatpush2.bf16.msra.mxu0 0
  %1396 = vmatprep.subr.bf16.mxu0 0
  %1397 = vmatpush2.bf16.msra.mxu0 0
  %1398 = vmatprep.subr.bf16.mxu0 0
  %1399 = vmatpush2.bf16.msra.mxu0 0
  %1400 = vmatprep.subr.bf16.mxu0 0
  %1401 = vmatpush2.bf16.msra.mxu0 0
  %1402 = vmatprep.mubr.bf16.mxu0 0
  %1403 = vmatmul.mubr.bf16.gmra.mxu0 %v1353
  %v1404 = vpop.f32.mrf.mxu0
  %v1405 = vadd.f32 0.0, %v1404
  %v1406 = vpop.f32.mrf.mxu0
  %v1407 = vpop.f32.mrf.mxu0
  %v1408 = vadd.f32 0.0, %v1407
  %v1409 = vpop.f32.mrf.mxu0
  %1410 = vmatprep.mubr.bf16.mxu0 0
  %1411 = vmatmul.mubr.bf16.gmra.mxu0 %v1356
  %v1412 = vpop.f32.mrf.mxu0
  %v1413 = vadd.f32 0.0, %v1412
  %v1414 = vpop.f32.mrf.mxu0
  %v1415 = vpop.f32.mrf.mxu0
  %v1416 = vadd.f32 0.0, %v1415
  %v1417 = vpop.f32.mrf.mxu0
  %1418 = vmatprep.mubr.bf16.mxu0 0
  %1419 = vmatmul.mubr.bf16.gmra.mxu0 %v1359
  %v1420 = vpop.f32.mrf.mxu0
  %v1421 = vadd.f32 0.0, %v1420
  %v1422 = vpop.f32.mrf.mxu0
  %v1423 = vpop.f32.mrf.mxu0
  %v1424 = vadd.f32 0.0, %v1423
  %v1425 = vpop.f32.mrf.mxu0
  %1426 = vmatprep.mubr.bf16.mxu0 0
  %1427 = vmatmul.mubr.bf16.gmra.mxu0 %v1362
  %v1428 = vpop.f32.mrf.mxu0
  %v1429 = vadd.f32 0.0, %v1428
  %v1430 = vpop.f32.mrf.mxu0
  %v1431 = vpop.f32.mrf.mxu0
  %v1432 = vadd.f32 0.0, %v1431
  %v1433 = vpop.f32.mrf.mxu0
  %1434 = vmatprep.mubr.bf16.mxu0 0
  %1435 = vmatmul.mubr.bf16.gmra.mxu0 %v1365
  %v1436 = vpop.f32.mrf.mxu0
  %v1437 = vadd.f32 0.0, %v1436
  %v1438 = vpop.f32.mrf.mxu0
  %v1439 = vpop.f32.mrf.mxu0
  %v1440 = vadd.f32 0.0, %v1439
  %v1441 = vpop.f32.mrf.mxu0
  %1442 = vmatprep.mubr.bf16.mxu0 0
  %1443 = vmatmul.mubr.bf16.gmra.mxu0 %v1368
  %v1444 = vpop.f32.mrf.mxu0
  %v1445 = vadd.f32 0.0, %v1444
  %v1446 = vpop.f32.mrf.mxu0
  %v1447 = vpop.f32.mrf.mxu0
  %v1448 = vadd.f32 0.0, %v1447
  %v1449 = vpop.f32.mrf.mxu0
  %1450 = vdwg.mxu0
  %v1451 = vpack.c.bf16 %v1408, %v1405
  %v1452 = vpack.c.bf16 %v1416, %v1413
  %v1453 = vpack.c.bf16 %v1424, %v1421
  %v1454 = vpack.c.bf16 %v1432, %v1429
  %v1455 = vpack.c.bf16 %v1440, %v1437
  %v1456 = vpack.c.bf16 %v1448, %v1445
  %v1457 = vpack.c.bf16 %v49, %v48
  %v1458 = vpack.c.bf16 %v51, %v50
  %v1460 = vsel %vm456, %v1451, 0
  %v1463 = vsel %vm456, %v1452, 0
  %v1466 = vsel %vm456, %v1453, 0
  %v1469 = vsel %vm456, %v1454, 0
  %v1472 = vsel %vm456, %v1455, 0
  %v1475 = vsel %vm456, %v1456, 0
  %1477 = vmatprep.subr.bf16.mxu0 0
  %1478 = vmatpush1.bf16.msra.mxu0 0
  %1479 = vmatprep.subr.bf16.mxu0 0
  %1480 = vmatpush1.bf16.msra.mxu0 0
  %1481 = vmatprep.subr.bf16.mxu0 0
  %1482 = vmatpush1.bf16.msra.mxu0 0
  %1483 = vmatprep.subr.bf16.mxu0 0
  %1484 = vmatpush1.bf16.msra.mxu0 0
  %1485 = vmatprep.subr.bf16.mxu0 0
  %1486 = vmatpush1.bf16.msra.mxu0 0
  %1487 = vmatprep.subr.bf16.mxu0 0
  %1488 = vmatpush1.bf16.msra.mxu0 0
  %1489 = vmatprep.subr.bf16.mxu0 0
  %1490 = vmatpush1.bf16.msra.mxu0 %v1458
  %1491 = vmatprep.subr.bf16.mxu0 0
  %1492 = vmatpush1.bf16.msra.mxu0 %v1457
  %1493 = vmatprep.subr.bf16.mxu0 0
  %1494 = vmatpush2.bf16.msra.mxu0 0
  %1495 = vmatprep.subr.bf16.mxu0 0
  %1496 = vmatpush2.bf16.msra.mxu0 0
  %1497 = vmatprep.subr.bf16.mxu0 0
  %1498 = vmatpush2.bf16.msra.mxu0 0
  %1499 = vmatprep.subr.bf16.mxu0 0
  %1500 = vmatpush2.bf16.msra.mxu0 0
  %1501 = vmatprep.subr.bf16.mxu0 0
  %1502 = vmatpush2.bf16.msra.mxu0 0
  %1503 = vmatprep.subr.bf16.mxu0 0
  %1504 = vmatpush2.bf16.msra.mxu0 0
  %1505 = vmatprep.subr.bf16.mxu0 0
  %1506 = vmatpush2.bf16.msra.mxu0 0
  %1507 = vmatprep.subr.bf16.mxu0 0
  %1508 = vmatpush2.bf16.msra.mxu0 0
  %1509 = vmatprep.mubr.bf16.mxu0 0
  %1510 = vmatmul.mubr.bf16.gmra.mxu0 %v1460
  %v1511 = vpop.f32.mrf.mxu0
  %v1512 = vadd.f32 0.0, %v1511
  %v1513 = vpop.f32.mrf.mxu0
  %v1514 = vpop.f32.mrf.mxu0
  %v1515 = vadd.f32 0.0, %v1514
  %v1516 = vpop.f32.mrf.mxu0
  %1517 = vmatprep.mubr.bf16.mxu0 0
  %1518 = vmatmul.mubr.bf16.gmra.mxu0 %v1463
  %v1519 = vpop.f32.mrf.mxu0
  %v1520 = vadd.f32 0.0, %v1519
  %v1521 = vpop.f32.mrf.mxu0
  %v1522 = vpop.f32.mrf.mxu0
  %v1523 = vadd.f32 0.0, %v1522
  %v1524 = vpop.f32.mrf.mxu0
  %1525 = vmatprep.mubr.bf16.mxu0 0
  %1526 = vmatmul.mubr.bf16.gmra.mxu0 %v1466
  %v1527 = vpop.f32.mrf.mxu0
  %v1528 = vadd.f32 0.0, %v1527
  %v1529 = vpop.f32.mrf.mxu0
  %v1530 = vpop.f32.mrf.mxu0
  %v1531 = vadd.f32 0.0, %v1530
  %v1532 = vpop.f32.mrf.mxu0
  %1533 = vmatprep.mubr.bf16.mxu0 0
  %1534 = vmatmul.mubr.bf16.gmra.mxu0 %v1469
  %v1535 = vpop.f32.mrf.mxu0
  %v1536 = vadd.f32 0.0, %v1535
  %v1537 = vpop.f32.mrf.mxu0
  %v1538 = vpop.f32.mrf.mxu0
  %v1539 = vadd.f32 0.0, %v1538
  %v1540 = vpop.f32.mrf.mxu0
  %1541 = vmatprep.mubr.bf16.mxu0 0
  %1542 = vmatmul.mubr.bf16.gmra.mxu0 %v1472
  %v1543 = vpop.f32.mrf.mxu0
  %v1544 = vadd.f32 0.0, %v1543
  %v1545 = vpop.f32.mrf.mxu0
  %v1546 = vpop.f32.mrf.mxu0
  %v1547 = vadd.f32 0.0, %v1546
  %v1548 = vpop.f32.mrf.mxu0
  %1549 = vmatprep.mubr.bf16.mxu0 0
  %1550 = vmatmul.mubr.bf16.gmra.mxu0 %v1475
  %v1551 = vpop.f32.mrf.mxu0
  %v1552 = vadd.f32 0.0, %v1551
  %v1553 = vpop.f32.mrf.mxu0
  %v1554 = vpop.f32.mrf.mxu0
  %v1555 = vadd.f32 0.0, %v1554
  %v1556 = vpop.f32.mrf.mxu0
  %1557 = vdwg.mxu0
  %v1558 = vadd.f32 %v907, %v1512
  %v1559 = vadd.f32 %v910, %v1515
  %v1560 = vadd.f32 %v915, %v1520
  %v1561 = vadd.f32 %v918, %v1523
  %v1562 = vadd.f32 %v923, %v1528
  %v1563 = vadd.f32 %v926, %v1531
  %v1564 = vadd.f32 %v931, %v1536
  %v1565 = vadd.f32 %v934, %v1539
  %v1566 = vadd.f32 %v939, %v1544
  %v1567 = vadd.f32 %v942, %v1547
  %v1568 = vadd.f32 %v947, %v1552
  %v1569 = vadd.f32 %v950, %v1555
  %v1570 = vpack.c.bf16 %v1559, %v1558
  %v1571 = vpack.c.bf16 %v1561, %v1560
  %v1572 = vpack.c.bf16 %v1563, %v1562
  %v1573 = vpack.c.bf16 %v1565, %v1564
  %v1574 = vpack.c.bf16 %v1567, %v1566
  %v1575 = vpack.c.bf16 %v1569, %v1568
  %v1576 = vpack.c.bf16 %v53, %v52
  %v1577 = vpack.c.bf16 %v55, %v54
  %v1578 = vlaneseq
  %v1579 = vshrl.u32 %v1578, 7
  %v1580 = vsub.s32 0, %v1579
  %v1581 = vrot.slane %v56, %v1580
  %v1583 = vsel %vm456, %v1570, 0
  %v1586 = vsel %vm456, %v1571, 0
  %v1589 = vsel %vm456, %v1572, 0
  %v1592 = vsel %vm456, %v1573, 0
  %v1595 = vsel %vm456, %v1574, 0
  %v1598 = vsel %vm456, %v1575, 0
  %1600 = vmatprep.subr.bf16.mxu0 0
  %1601 = vmatpush1.bf16.msra.mxu0 0
  %1602 = vmatprep.subr.bf16.mxu0 0
  %1603 = vmatpush1.bf16.msra.mxu0 0
  %1604 = vmatprep.subr.bf16.mxu0 0
  %1605 = vmatpush1.bf16.msra.mxu0 0
  %1606 = vmatprep.subr.bf16.mxu0 0
  %1607 = vmatpush1.bf16.msra.mxu0 0
  %1608 = vmatprep.subr.bf16.mxu0 0
  %1609 = vmatpush1.bf16.msra.mxu0 0
  %1610 = vmatprep.subr.bf16.mxu0 0
  %1611 = vmatpush1.bf16.msra.mxu0 0
  %1612 = vmatprep.subr.bf16.mxu0 0
  %1613 = vmatpush1.bf16.msra.mxu0 %v1577
  %1614 = vmatprep.subr.bf16.mxu0 0
  %1615 = vmatpush1.bf16.msra.mxu0 %v1576
  %1616 = vmatprep.subr.bf16.mxu0 0
  %1617 = vmatpush2.bf16.msra.mxu0 0
  %1618 = vmatprep.subr.bf16.mxu0 0
  %1619 = vmatpush2.bf16.msra.mxu0 0
  %1620 = vmatprep.subr.bf16.mxu0 0
  %1621 = vmatpush2.bf16.msra.mxu0 0
  %1622 = vmatprep.subr.bf16.mxu0 0
  %1623 = vmatpush2.bf16.msra.mxu0 0
  %1624 = vmatprep.subr.bf16.mxu0 0
  %1625 = vmatpush2.bf16.msra.mxu0 0
  %1626 = vmatprep.subr.bf16.mxu0 0
  %1627 = vmatpush2.bf16.msra.mxu0 0
  %1628 = vmatprep.subr.bf16.mxu0 0
  %1629 = vmatpush2.bf16.msra.mxu0 0
  %1630 = vmatprep.subr.bf16.mxu0 0
  %1631 = vmatpush2.bf16.msra.mxu0 0
  %1632 = vmatprep.mubr.bf16.mxu0 0
  %1633 = vmatmul.mubr.bf16.gmra.mxu0 %v1583
  %v1634 = vpop.f32.mrf.mxu0
  %v1635 = vadd.f32 %v1581, %v1634
  %v1636 = vpop.f32.mrf.mxu0
  %v1637 = vpop.f32.mrf.mxu0
  %v1638 = vadd.f32 %v1581, %v1637
  %v1639 = vpop.f32.mrf.mxu0
  %1640 = vmatprep.mubr.bf16.mxu0 0
  %1641 = vmatmul.mubr.bf16.gmra.mxu0 %v1586
  %v1642 = vpop.f32.mrf.mxu0
  %v1643 = vadd.f32 %v1581, %v1642
  %v1644 = vpop.f32.mrf.mxu0
  %v1645 = vpop.f32.mrf.mxu0
  %v1646 = vadd.f32 %v1581, %v1645
  %v1647 = vpop.f32.mrf.mxu0
  %1648 = vmatprep.mubr.bf16.mxu0 0
  %1649 = vmatmul.mubr.bf16.gmra.mxu0 %v1589
  %v1650 = vpop.f32.mrf.mxu0
  %v1651 = vadd.f32 %v1581, %v1650
  %v1652 = vpop.f32.mrf.mxu0
  %v1653 = vpop.f32.mrf.mxu0
  %v1654 = vadd.f32 %v1581, %v1653
  %v1655 = vpop.f32.mrf.mxu0
  %1656 = vmatprep.mubr.bf16.mxu0 0
  %1657 = vmatmul.mubr.bf16.gmra.mxu0 %v1592
  %v1658 = vpop.f32.mrf.mxu0
  %v1659 = vadd.f32 %v1581, %v1658
  %v1660 = vpop.f32.mrf.mxu0
  %v1661 = vpop.f32.mrf.mxu0
  %v1662 = vadd.f32 %v1581, %v1661
  %v1663 = vpop.f32.mrf.mxu0
  %1664 = vmatprep.mubr.bf16.mxu0 0
  %1665 = vmatmul.mubr.bf16.gmra.mxu0 %v1595
  %v1666 = vpop.f32.mrf.mxu0
  %v1667 = vadd.f32 %v1581, %v1666
  %v1668 = vpop.f32.mrf.mxu0
  %v1669 = vpop.f32.mrf.mxu0
  %v1670 = vadd.f32 %v1581, %v1669
  %v1671 = vpop.f32.mrf.mxu0
  %1672 = vmatprep.mubr.bf16.mxu0 0
  %1673 = vmatmul.mubr.bf16.gmra.mxu0 %v1598
  %v1674 = vpop.f32.mrf.mxu0
  %v1675 = vadd.f32 %v1581, %v1674
  %v1676 = vpop.f32.mrf.mxu0
  %v1677 = vpop.f32.mrf.mxu0
  %v1678 = vadd.f32 %v1581, %v1677
  %v1679 = vpop.f32.mrf.mxu0
  %1680 = vdwg.mxu0
  %1681 = vst [vmem:[%s2] sm:$0xff] %v1635
  %1682 = vst [vmem:[%s2 + $0x8] sm:$0xff] %v1638
  %1683 = vst [vmem:[%s2 + $0x10] sm:$0xff] %v1643
  %1684 = vst [vmem:[%s2 + $0x18] sm:$0xff] %v1646
  %1685 = vst [vmem:[%s2 + $0x20] sm:$0xff] %v1651
  %1686 = vst [vmem:[%s2 + $0x28] sm:$0xff] %v1654
  %1687 = vst [vmem:[%s2 + $0x30] sm:$0xff] %v1659
  %1688 = vst [vmem:[%s2 + $0x38] sm:$0xff] %v1662
  %1689 = vst [vmem:[%s2 + $0x40] sm:$0xff] %v1667
  %1690 = vst [vmem:[%s2 + $0x48] sm:$0xff] %v1670
  %1691 = vst [vmem:[%s2 + $0x50] sm:$0xff] %v1675
  %1692 = vst [vmem:[%s2 + $0x58] sm:$0xff] %v1678
  %v1693 = vpack.c.bf16 %v958, %v955
  %v1694 = vpack.c.bf16 %v966, %v963
  %v1695 = vpack.c.bf16 %v974, %v971
  %v1696 = vpack.c.bf16 %v982, %v979
  %v1697 = vpack.c.bf16 %v990, %v987
  %v1698 = vpack.c.bf16 %v998, %v995
  %v1700 = vsel %vm456, %v1693, 0
  %v1703 = vsel %vm456, %v1694, 0
  %v1706 = vsel %vm456, %v1695, 0
  %v1709 = vsel %vm456, %v1696, 0
  %v1712 = vsel %vm456, %v1697, 0
  %v1715 = vsel %vm456, %v1698, 0
  %1717 = vmatprep.subr.bf16.mxu0 0
  %1718 = vmatpush1.bf16.msra.mxu0 0
  %1719 = vmatprep.subr.bf16.mxu0 0
  %1720 = vmatpush1.bf16.msra.mxu0 0
  %1721 = vmatprep.subr.bf16.mxu0 0
  %1722 = vmatpush1.bf16.msra.mxu0 0
  %1723 = vmatprep.subr.bf16.mxu0 0
  %1724 = vmatpush1.bf16.msra.mxu0 0
  %1725 = vmatprep.subr.bf16.mxu0 0
  %1726 = vmatpush1.bf16.msra.mxu0 0
  %1727 = vmatprep.subr.bf16.mxu0 0
  %1728 = vmatpush1.bf16.msra.mxu0 0
  %1729 = vmatprep.subr.bf16.mxu0 0
  %1730 = vmatpush1.bf16.msra.mxu0 %v1008
  %1731 = vmatprep.subr.bf16.mxu0 0
  %1732 = vmatpush1.bf16.msra.mxu0 %v1007
  %1733 = vmatprep.subr.bf16.mxu0 0
  %1734 = vmatpush2.bf16.msra.mxu0 0
  %1735 = vmatprep.subr.bf16.mxu0 0
  %1736 = vmatpush2.bf16.msra.mxu0 0
  %1737 = vmatprep.subr.bf16.mxu0 0
  %1738 = vmatpush2.bf16.msra.mxu0 0
  %1739 = vmatprep.subr.bf16.mxu0 0
  %1740 = vmatpush2.bf16.msra.mxu0 0
  %1741 = vmatprep.subr.bf16.mxu0 0
  %1742 = vmatpush2.bf16.msra.mxu0 0
  %1743 = vmatprep.subr.bf16.mxu0 0
  %1744 = vmatpush2.bf16.msra.mxu0 0
  %1745 = vmatprep.subr.bf16.mxu0 0
  %1746 = vmatpush2.bf16.msra.mxu0 0
  %1747 = vmatprep.subr.bf16.mxu0 0
  %1748 = vmatpush2.bf16.msra.mxu0 0
  %1749 = vmatprep.mubr.bf16.mxu0 0
  %1750 = vmatmul.mubr.bf16.gmra.mxu0 %v1700
  %v1751 = vpop.f32.mrf.mxu0
  %v1752 = vadd.f32 0.0, %v1751
  %v1753 = vpop.f32.mrf.mxu0
  %v1754 = vpop.f32.mrf.mxu0
  %v1755 = vadd.f32 0.0, %v1754
  %v1756 = vpop.f32.mrf.mxu0
  %1757 = vmatprep.mubr.bf16.mxu0 0
  %1758 = vmatmul.mubr.bf16.gmra.mxu0 %v1703
  %v1759 = vpop.f32.mrf.mxu0
  %v1760 = vadd.f32 0.0, %v1759
  %v1761 = vpop.f32.mrf.mxu0
  %v1762 = vpop.f32.mrf.mxu0
  %v1763 = vadd.f32 0.0, %v1762
  %v1764 = vpop.f32.mrf.mxu0
  %1765 = vmatprep.mubr.bf16.mxu0 0
  %1766 = vmatmul.mubr.bf16.gmra.mxu0 %v1706
  %v1767 = vpop.f32.mrf.mxu0
  %v1768 = vadd.f32 0.0, %v1767
  %v1769 = vpop.f32.mrf.mxu0
  %v1770 = vpop.f32.mrf.mxu0
  %v1771 = vadd.f32 0.0, %v1770
  %v1772 = vpop.f32.mrf.mxu0
  %1773 = vmatprep.mubr.bf16.mxu0 0
  %1774 = vmatmul.mubr.bf16.gmra.mxu0 %v1709
  %v1775 = vpop.f32.mrf.mxu0
  %v1776 = vadd.f32 0.0, %v1775
  %v1777 = vpop.f32.mrf.mxu0
  %v1778 = vpop.f32.mrf.mxu0
  %v1779 = vadd.f32 0.0, %v1778
  %v1780 = vpop.f32.mrf.mxu0
  %1781 = vmatprep.mubr.bf16.mxu0 0
  %1782 = vmatmul.mubr.bf16.gmra.mxu0 %v1712
  %v1783 = vpop.f32.mrf.mxu0
  %v1784 = vadd.f32 0.0, %v1783
  %v1785 = vpop.f32.mrf.mxu0
  %v1786 = vpop.f32.mrf.mxu0
  %v1787 = vadd.f32 0.0, %v1786
  %v1788 = vpop.f32.mrf.mxu0
  %1789 = vmatprep.mubr.bf16.mxu0 0
  %1790 = vmatmul.mubr.bf16.gmra.mxu0 %v1715
  %v1791 = vpop.f32.mrf.mxu0
  %v1792 = vadd.f32 0.0, %v1791
  %v1793 = vpop.f32.mrf.mxu0
  %v1794 = vpop.f32.mrf.mxu0
  %v1795 = vadd.f32 0.0, %v1794
  %v1796 = vpop.f32.mrf.mxu0
  %1797 = vdwg.mxu0
  %v1798 = vpack.c.bf16 %v1755, %v1752
  %v1799 = vpack.c.bf16 %v1763, %v1760
  %v1800 = vpack.c.bf16 %v1771, %v1768
  %v1801 = vpack.c.bf16 %v1779, %v1776
  %v1802 = vpack.c.bf16 %v1787, %v1784
  %v1803 = vpack.c.bf16 %v1795, %v1792
  %v1805 = vsel %vm456, %v1798, 0
  %v1808 = vsel %vm456, %v1799, 0
  %v1811 = vsel %vm456, %v1800, 0
  %v1814 = vsel %vm456, %v1801, 0
  %v1817 = vsel %vm456, %v1802, 0
  %v1820 = vsel %vm456, %v1803, 0
  %1822 = vmatprep.subr.bf16.mxu0 0
  %1823 = vmatpush1.bf16.xpose.msra.mxu0 0
  %1824 = vmatprep.subr.bf16.mxu0 0
  %1825 = vmatpush1.bf16.xpose.msra.mxu0 0
  %1826 = vmatprep.subr.bf16.mxu0 0
  %1827 = vmatpush1.bf16.xpose.msra.mxu0 %v1715
  %1828 = vmatprep.subr.bf16.mxu0 0
  %1829 = vmatpush1.bf16.xpose.msra.mxu0 %v1712
  %1830 = vmatprep.subr.bf16.mxu0 0
  %1831 = vmatpush1.bf16.xpose.msra.mxu0 %v1709
  %1832 = vmatprep.subr.bf16.mxu0 0
  %1833 = vmatpush1.bf16.xpose.msra.mxu0 %v1706
  %1834 = vmatprep.subr.bf16.mxu0 0
  %1835 = vmatpush1.bf16.xpose.msra.mxu0 %v1703
  %1836 = vmatprep.subr.bf16.mxu0 0
  %1837 = vmatpush1.bf16.xpose.msra.mxu0 %v1700
  %1838 = vmatprep.subr.bf16.mxu0 0
  %1839 = vmatpush2.bf16.xpose.msra.mxu0 0
  %1840 = vmatprep.subr.bf16.mxu0 0
  %1841 = vmatpush2.bf16.xpose.msra.mxu0 0
  %1842 = vmatprep.subr.bf16.mxu0 0
  %1843 = vmatpush2.bf16.xpose.msra.mxu0 0
  %1844 = vmatprep.subr.bf16.mxu0 0
  %1845 = vmatpush2.bf16.xpose.msra.mxu0 0
  %1846 = vmatprep.subr.bf16.mxu0 0
  %1847 = vmatpush2.bf16.xpose.msra.mxu0 0
  %1848 = vmatprep.subr.bf16.mxu0 0
  %1849 = vmatpush2.bf16.xpose.msra.mxu0 0
  %1850 = vmatprep.subr.bf16.mxu0 0
  %1851 = vmatpush2.bf16.xpose.msra.mxu0 0
  %1852 = vmatprep.subr.bf16.mxu0 0
  %1853 = vmatpush2.bf16.xpose.msra.mxu0 0
  %1854 = vmatprep.mubr.bf16.mxu0 0
  %1855 = vmatmul.mubr.bf16.gmra.mxu0 %v1805
  %v1856 = vpop.f32.mrf.mxu0
  %v1857 = vadd.f32 0.0, %v1856
  %v1858 = vpop.f32.mrf.mxu0
  %v1859 = vpop.f32.mrf.mxu0
  %v1860 = vadd.f32 0.0, %v1859
  %v1861 = vpop.f32.mrf.mxu0
  %1862 = vmatprep.mubr.bf16.mxu0 0
  %1863 = vmatmul.mubr.bf16.gmra.mxu0 %v1808
  %v1864 = vpop.f32.mrf.mxu0
  %v1865 = vadd.f32 0.0, %v1864
  %v1866 = vpop.f32.mrf.mxu0
  %v1867 = vpop.f32.mrf.mxu0
  %v1868 = vadd.f32 0.0, %v1867
  %v1869 = vpop.f32.mrf.mxu0
  %1870 = vmatprep.mubr.bf16.mxu0 0
  %1871 = vmatmul.mubr.bf16.gmra.mxu0 %v1811
  %v1872 = vpop.f32.mrf.mxu0
  %v1873 = vadd.f32 0.0, %v1872
  %v1874 = vpop.f32.mrf.mxu0
  %v1875 = vpop.f32.mrf.mxu0
  %v1876 = vadd.f32 0.0, %v1875
  %v1877 = vpop.f32.mrf.mxu0
  %1878 = vmatprep.mubr.bf16.mxu0 0
  %1879 = vmatmul.mubr.bf16.gmra.mxu0 %v1814
  %v1880 = vpop.f32.mrf.mxu0
  %v1881 = vadd.f32 0.0, %v1880
  %v1882 = vpop.f32.mrf.mxu0
  %v1883 = vpop.f32.mrf.mxu0
  %v1884 = vadd.f32 0.0, %v1883
  %v1885 = vpop.f32.mrf.mxu0
  %1886 = vmatprep.mubr.bf16.mxu0 0
  %1887 = vmatmul.mubr.bf16.gmra.mxu0 %v1817
  %v1888 = vpop.f32.mrf.mxu0
  %v1889 = vadd.f32 0.0, %v1888
  %v1890 = vpop.f32.mrf.mxu0
  %v1891 = vpop.f32.mrf.mxu0
  %v1892 = vadd.f32 0.0, %v1891
  %v1893 = vpop.f32.mrf.mxu0
  %1894 = vmatprep.mubr.bf16.mxu0 0
  %1895 = vmatmul.mubr.bf16.gmra.mxu0 %v1820
  %v1896 = vpop.f32.mrf.mxu0
  %v1897 = vadd.f32 0.0, %v1896
  %v1898 = vpop.f32.mrf.mxu0
  %v1899 = vpop.f32.mrf.mxu0
  %v1900 = vadd.f32 0.0, %v1899
  %v1901 = vpop.f32.mrf.mxu0
  %1902 = vdwg.mxu0
  %v1903 = vsel %vm1213, %v1857, -inf
  %1904 = vmax.xlane.f32.xlu0 %v1903
  %v1905 = vpop.xlane.xlu0 %1904
  %v1906 = vsel %vm1213, %v1860, -inf
  %1907 = vmax.xlane.f32.xlu0 %v1906
  %v1908 = vpop.xlane.xlu0 %1907
  %v1909 = vsel %vm1213, %v1865, -inf
  %1910 = vmax.xlane.f32.xlu0 %v1909
  %v1911 = vpop.xlane.xlu0 %1910
  %v1912 = vsel %vm1213, %v1868, -inf
  %1913 = vmax.xlane.f32.xlu0 %v1912
  %v1914 = vpop.xlane.xlu0 %1913
  %v1915 = vsel %vm1213, %v1873, -inf
  %1916 = vmax.xlane.f32.xlu0 %v1915
  %v1917 = vpop.xlane.xlu0 %1916
  %v1918 = vsel %vm1213, %v1876, -inf
  %1919 = vmax.xlane.f32.xlu0 %v1918
  %v1920 = vpop.xlane.xlu0 %1919
  %v1921 = vsel %vm1213, %v1881, -inf
  %1922 = vmax.xlane.f32.xlu0 %v1921
  %v1923 = vpop.xlane.xlu0 %1922
  %v1924 = vsel %vm1213, %v1884, -inf
  %1925 = vmax.xlane.f32.xlu0 %v1924
  %v1926 = vpop.xlane.xlu0 %1925
  %v1927 = vsel %vm1213, %v1889, -inf
  %1928 = vmax.xlane.f32.xlu0 %v1927
  %v1929 = vpop.xlane.xlu0 %1928
  %v1930 = vsel %vm1213, %v1892, -inf
  %1931 = vmax.xlane.f32.xlu0 %v1930
  %v1932 = vpop.xlane.xlu0 %1931
  %v1933 = vsel %vm1213, %v1897, -inf
  %1934 = vmax.xlane.f32.xlu0 %v1933
  %v1935 = vpop.xlane.xlu0 %1934
  %v1936 = vsel %vm1213, %v1900, -inf
  %1937 = vmax.xlane.f32.xlu0 %v1936
  %v1938 = vpop.xlane.xlu0 %1937
  %v1939 = vsub.f32 %v1857, %v1905
  %v1940 = vsub.f32 %v1860, %v1908
  %v1941 = vsub.f32 %v1865, %v1911
  %v1942 = vsub.f32 %v1868, %v1914
  %v1943 = vsub.f32 %v1873, %v1917
  %v1944 = vsub.f32 %v1876, %v1920
  %v1945 = vsub.f32 %v1881, %v1923
  %v1946 = vsub.f32 %v1884, %v1926
  %v1947 = vsub.f32 %v1889, %v1929
  %v1948 = vsub.f32 %v1892, %v1932
  %v1949 = vsub.f32 %v1897, %v1935
  %v1950 = vsub.f32 %v1900, %v1938
  %v1951 = vmul.f32 %v1939, 1.442695
  %v1952 = vpow.pop %v1951
  %v1953 = vmul.f32 %v1940, 1.442695
  %v1954 = vpow.pop %v1953
  %v1955 = vmul.f32 %v1941, 1.442695
  %v1956 = vpow.pop %v1955
  %v1957 = vmul.f32 %v1942, 1.442695
  %v1958 = vpow.pop %v1957
  %v1959 = vmul.f32 %v1943, 1.442695
  %v1960 = vpow.pop %v1959
  %v1961 = vmul.f32 %v1944, 1.442695
  %v1962 = vpow.pop %v1961
  %v1963 = vmul.f32 %v1945, 1.442695
  %v1964 = vpow.pop %v1963
  %v1965 = vmul.f32 %v1946, 1.442695
  %v1966 = vpow.pop %v1965
  %v1967 = vmul.f32 %v1947, 1.442695
  %v1968 = vpow.pop %v1967
  %v1969 = vmul.f32 %v1948, 1.442695
  %v1970 = vpow.pop %v1969
  %v1971 = vmul.f32 %v1949, 1.442695
  %v1972 = vpow.pop %v1971
  %v1973 = vmul.f32 %v1950, 1.442695
  %v1974 = vpow.pop %v1973
  %v1975 = vsel %vm1213, %v1952, 0.0
  %1976 = vadd.xlane.f32.xlu0 %v1975
  %v1977 = vpop.xlane.xlu0 %1976
  %v1978 = vsel %vm1213, %v1954, 0.0
  %1979 = vadd.xlane.f32.xlu0 %v1978
  %v1980 = vpop.xlane.xlu0 %1979
  %v1981 = vsel %vm1213, %v1956, 0.0
  %1982 = vadd.xlane.f32.xlu0 %v1981
  %v1983 = vpop.xlane.xlu0 %1982
  %v1984 = vsel %vm1213, %v1958, 0.0
  %1985 = vadd.xlane.f32.xlu0 %v1984
  %v1986 = vpop.xlane.xlu0 %1985
  %v1987 = vsel %vm1213, %v1960, 0.0
  %1988 = vadd.xlane.f32.xlu0 %v1987
  %v1989 = vpop.xlane.xlu0 %1988
  %v1990 = vsel %vm1213, %v1962, 0.0
  %1991 = vadd.xlane.f32.xlu0 %v1990
  %v1992 = vpop.xlane.xlu0 %1991
  %v1993 = vsel %vm1213, %v1964, 0.0
  %1994 = vadd.xlane.f32.xlu0 %v1993
  %v1995 = vpop.xlane.xlu0 %1994
  %v1996 = vsel %vm1213, %v1966, 0.0
  %1997 = vadd.xlane.f32.xlu0 %v1996
  %v1998 = vpop.xlane.xlu0 %1997
  %v1999 = vsel %vm1213, %v1968, 0.0
  %2000 = vadd.xlane.f32.xlu0 %v1999
  %v2001 = vpop.xlane.xlu0 %2000
  %v2002 = vsel %vm1213, %v1970, 0.0
  %2003 = vadd.xlane.f32.xlu0 %v2002
  %v2004 = vpop.xlane.xlu0 %2003
  %v2005 = vsel %vm1213, %v1972, 0.0
  %2006 = vadd.xlane.f32.xlu0 %v2005
  %v2007 = vpop.xlane.xlu0 %2006
  %v2008 = vsel %vm1213, %v1974, 0.0
  %2009 = vadd.xlane.f32.xlu0 %v2008
  %v2010 = vpop.xlane.xlu0 %2009
  %v2011 = vrcp.pop %v1977
  %v2012 = vrcp.pop %v1980
  %v2013 = vrcp.pop %v1983
  %v2014 = vrcp.pop %v1986
  %v2015 = vrcp.pop %v1989
  %v2016 = vrcp.pop %v1992
  %v2017 = vrcp.pop %v1995
  %v2018 = vrcp.pop %v1998
  %v2019 = vrcp.pop %v2001
  %v2020 = vrcp.pop %v2004
  %v2021 = vrcp.pop %v2007
  %v2022 = vrcp.pop %v2010
  %v2023 = vmul.f32 %v1952, %v2011
  %v2024 = vmul.f32 %v1954, %v2012
  %v2025 = vmul.f32 %v1956, %v2013
  %v2026 = vmul.f32 %v1958, %v2014
  %v2027 = vmul.f32 %v1960, %v2015
  %v2028 = vmul.f32 %v1962, %v2016
  %v2029 = vmul.f32 %v1964, %v2017
  %v2030 = vmul.f32 %v1966, %v2018
  %v2031 = vmul.f32 %v1968, %v2019
  %v2032 = vmul.f32 %v1970, %v2020
  %v2033 = vmul.f32 %v1972, %v2021
  %v2034 = vmul.f32 %v1974, %v2022
  %v2035 = vpack.c.bf16 %v2024, %v2023
  %v2036 = vpack.c.bf16 %v2026, %v2025
  %v2037 = vpack.c.bf16 %v2028, %v2027
  %v2038 = vpack.c.bf16 %v2030, %v2029
  %v2039 = vpack.c.bf16 %v2032, %v2031
  %v2040 = vpack.c.bf16 %v2034, %v2033
  %v2042 = vsel %vm1213, %v2035, 0
  %v2045 = vsel %vm1213, %v2036, 0
  %v2048 = vsel %vm1213, %v2037, 0
  %v2051 = vsel %vm1213, %v2038, 0
  %v2054 = vsel %vm1213, %v2039, 0
  %v2057 = vsel %vm1213, %v2040, 0
  %2059 = vmatprep.subr.bf16.mxu0 0
  %2060 = vmatpush1.bf16.msra.mxu0 0
  %2061 = vmatprep.subr.bf16.mxu0 0
  %2062 = vmatpush1.bf16.msra.mxu0 0
  %2063 = vmatprep.subr.bf16.mxu0 0
  %2064 = vmatpush1.bf16.msra.mxu0 %v1698
  %2065 = vmatprep.subr.bf16.mxu0 0
  %2066 = vmatpush1.bf16.msra.mxu0 %v1697
  %2067 = vmatprep.subr.bf16.mxu0 0
  %2068 = vmatpush1.bf16.msra.mxu0 %v1696
  %2069 = vmatprep.subr.bf16.mxu0 0
  %2070 = vmatpush1.bf16.msra.mxu0 %v1695
  %2071 = vmatprep.subr.bf16.mxu0 0
  %2072 = vmatpush1.bf16.msra.mxu0 %v1694
  %2073 = vmatprep.subr.bf16.mxu0 0
  %2074 = vmatpush1.bf16.msra.mxu0 %v1693
  %2075 = vmatprep.subr.bf16.mxu0 0
  %2076 = vmatpush2.bf16.msra.mxu0 0
  %2077 = vmatprep.subr.bf16.mxu0 0
  %2078 = vmatpush2.bf16.msra.mxu0 0
  %2079 = vmatprep.subr.bf16.mxu0 0
  %2080 = vmatpush2.bf16.msra.mxu0 0
  %2081 = vmatprep.subr.bf16.mxu0 0
  %2082 = vmatpush2.bf16.msra.mxu0 0
  %2083 = vmatprep.subr.bf16.mxu0 0
  %2084 = vmatpush2.bf16.msra.mxu0 0
  %2085 = vmatprep.subr.bf16.mxu0 0
  %2086 = vmatpush2.bf16.msra.mxu0 0
  %2087 = vmatprep.subr.bf16.mxu0 0
  %2088 = vmatpush2.bf16.msra.mxu0 0
  %2089 = vmatprep.subr.bf16.mxu0 0
  %2090 = vmatpush2.bf16.msra.mxu0 0
  %2091 = vmatprep.mubr.bf16.mxu0 0
  %2092 = vmatmul.mubr.bf16.gmra.mxu0 %v2042
  %v2093 = vpop.f32.mrf.mxu0
  %v2094 = vadd.f32 0.0, %v2093
  %v2095 = vpop.f32.mrf.mxu0
  %v2096 = vpop.f32.mrf.mxu0
  %v2097 = vadd.f32 0.0, %v2096
  %v2098 = vpop.f32.mrf.mxu0
  %2099 = vmatprep.mubr.bf16.mxu0 0
  %2100 = vmatmul.mubr.bf16.gmra.mxu0 %v2045
  %v2101 = vpop.f32.mrf.mxu0
  %v2102 = vadd.f32 0.0, %v2101
  %v2103 = vpop.f32.mrf.mxu0
  %v2104 = vpop.f32.mrf.mxu0
  %v2105 = vadd.f32 0.0, %v2104
  %v2106 = vpop.f32.mrf.mxu0
  %2107 = vmatprep.mubr.bf16.mxu0 0
  %2108 = vmatmul.mubr.bf16.gmra.mxu0 %v2048
  %v2109 = vpop.f32.mrf.mxu0
  %v2110 = vadd.f32 0.0, %v2109
  %v2111 = vpop.f32.mrf.mxu0
  %v2112 = vpop.f32.mrf.mxu0
  %v2113 = vadd.f32 0.0, %v2112
  %v2114 = vpop.f32.mrf.mxu0
  %2115 = vmatprep.mubr.bf16.mxu0 0
  %2116 = vmatmul.mubr.bf16.gmra.mxu0 %v2051
  %v2117 = vpop.f32.mrf.mxu0
  %v2118 = vadd.f32 0.0, %v2117
  %v2119 = vpop.f32.mrf.mxu0
  %v2120 = vpop.f32.mrf.mxu0
  %v2121 = vadd.f32 0.0, %v2120
  %v2122 = vpop.f32.mrf.mxu0
  %2123 = vmatprep.mubr.bf16.mxu0 0
  %2124 = vmatmul.mubr.bf16.gmra.mxu0 %v2054
  %v2125 = vpop.f32.mrf.mxu0
  %v2126 = vadd.f32 0.0, %v2125
  %v2127 = vpop.f32.mrf.mxu0
  %v2128 = vpop.f32.mrf.mxu0
  %v2129 = vadd.f32 0.0, %v2128
  %v2130 = vpop.f32.mrf.mxu0
  %2131 = vmatprep.mubr.bf16.mxu0 0
  %2132 = vmatmul.mubr.bf16.gmra.mxu0 %v2057
  %v2133 = vpop.f32.mrf.mxu0
  %v2134 = vadd.f32 0.0, %v2133
  %v2135 = vpop.f32.mrf.mxu0
  %v2136 = vpop.f32.mrf.mxu0
  %v2137 = vadd.f32 0.0, %v2136
  %v2138 = vpop.f32.mrf.mxu0
  %2139 = vdwg.mxu0
  %v2140 = vpack.c.bf16 %v2097, %v2094
  %v2141 = vpack.c.bf16 %v2105, %v2102
  %v2142 = vpack.c.bf16 %v2113, %v2110
  %v2143 = vpack.c.bf16 %v2121, %v2118
  %v2144 = vpack.c.bf16 %v2129, %v2126
  %v2145 = vpack.c.bf16 %v2137, %v2134
  %v2147 = vsel %vm456, %v2140, 0
  %v2150 = vsel %vm456, %v2141, 0
  %v2153 = vsel %vm456, %v2142, 0
  %v2156 = vsel %vm456, %v2143, 0
  %v2159 = vsel %vm456, %v2144, 0
  %v2162 = vsel %vm456, %v2145, 0
  %2164 = vmatprep.subr.bf16.mxu0 0
  %2165 = vmatpush1.bf16.msra.mxu0 0
  %2166 = vmatprep.subr.bf16.mxu0 0
  %2167 = vmatpush1.bf16.msra.mxu0 0
  %2168 = vmatprep.subr.bf16.mxu0 0
  %2169 = vmatpush1.bf16.msra.mxu0 0
  %2170 = vmatprep.subr.bf16.mxu0 0
  %2171 = vmatpush1.bf16.msra.mxu0 0
  %2172 = vmatprep.subr.bf16.mxu0 0
  %2173 = vmatpush1.bf16.msra.mxu0 0
  %2174 = vmatprep.subr.bf16.mxu0 0
  %2175 = vmatpush1.bf16.msra.mxu0 0
  %2176 = vmatprep.subr.bf16.mxu0 0
  %2177 = vmatpush1.bf16.msra.mxu0 %v1458
  %2178 = vmatprep.subr.bf16.mxu0 0
  %2179 = vmatpush1.bf16.msra.mxu0 %v1457
  %2180 = vmatprep.subr.bf16.mxu0 0
  %2181 = vmatpush2.bf16.msra.mxu0 0
  %2182 = vmatprep.subr.bf16.mxu0 0
  %2183 = vmatpush2.bf16.msra.mxu0 0
  %2184 = vmatprep.subr.bf16.mxu0 0
  %2185 = vmatpush2.bf16.msra.mxu0 0
  %2186 = vmatprep.subr.bf16.mxu0 0
  %2187 = vmatpush2.bf16.msra.mxu0 0
  %2188 = vmatprep.subr.bf16.mxu0 0
  %2189 = vmatpush2.bf16.msra.mxu0 0
  %2190 = vmatprep.subr.bf16.mxu0 0
  %2191 = vmatpush2.bf16.msra.mxu0 0
  %2192 = vmatprep.subr.bf16.mxu0 0
  %2193 = vmatpush2.bf16.msra.mxu0 0
  %2194 = vmatprep.subr.bf16.mxu0 0
  %2195 = vmatpush2.bf16.msra.mxu0 0
  %2196 = vmatprep.mubr.bf16.mxu0 0
  %2197 = vmatmul.mubr.bf16.gmra.mxu0 %v2147
  %v2198 = vpop.f32.mrf.mxu0
  %v2199 = vadd.f32 0.0, %v2198
  %v2200 = vpop.f32.mrf.mxu0
  %v2201 = vpop.f32.mrf.mxu0
  %v2202 = vadd.f32 0.0, %v2201
  %v2203 = vpop.f32.mrf.mxu0
  %2204 = vmatprep.mubr.bf16.mxu0 0
  %2205 = vmatmul.mubr.bf16.gmra.mxu0 %v2150
  %v2206 = vpop.f32.mrf.mxu0
  %v2207 = vadd.f32 0.0, %v2206
  %v2208 = vpop.f32.mrf.mxu0
  %v2209 = vpop.f32.mrf.mxu0
  %v2210 = vadd.f32 0.0, %v2209
  %v2211 = vpop.f32.mrf.mxu0
  %2212 = vmatprep.mubr.bf16.mxu0 0
  %2213 = vmatmul.mubr.bf16.gmra.mxu0 %v2153
  %v2214 = vpop.f32.mrf.mxu0
  %v2215 = vadd.f32 0.0, %v2214
  %v2216 = vpop.f32.mrf.mxu0
  %v2217 = vpop.f32.mrf.mxu0
  %v2218 = vadd.f32 0.0, %v2217
  %v2219 = vpop.f32.mrf.mxu0
  %2220 = vmatprep.mubr.bf16.mxu0 0
  %2221 = vmatmul.mubr.bf16.gmra.mxu0 %v2156
  %v2222 = vpop.f32.mrf.mxu0
  %v2223 = vadd.f32 0.0, %v2222
  %v2224 = vpop.f32.mrf.mxu0
  %v2225 = vpop.f32.mrf.mxu0
  %v2226 = vadd.f32 0.0, %v2225
  %v2227 = vpop.f32.mrf.mxu0
  %2228 = vmatprep.mubr.bf16.mxu0 0
  %2229 = vmatmul.mubr.bf16.gmra.mxu0 %v2159
  %v2230 = vpop.f32.mrf.mxu0
  %v2231 = vadd.f32 0.0, %v2230
  %v2232 = vpop.f32.mrf.mxu0
  %v2233 = vpop.f32.mrf.mxu0
  %v2234 = vadd.f32 0.0, %v2233
  %v2235 = vpop.f32.mrf.mxu0
  %2236 = vmatprep.mubr.bf16.mxu0 0
  %2237 = vmatmul.mubr.bf16.gmra.mxu0 %v2162
  %v2238 = vpop.f32.mrf.mxu0
  %v2239 = vadd.f32 0.0, %v2238
  %v2240 = vpop.f32.mrf.mxu0
  %v2241 = vpop.f32.mrf.mxu0
  %v2242 = vadd.f32 0.0, %v2241
  %v2243 = vpop.f32.mrf.mxu0
  %2244 = vdwg.mxu0
  %v2245 = vadd.f32 %v955, %v2199
  %v2246 = vadd.f32 %v958, %v2202
  %v2247 = vadd.f32 %v963, %v2207
  %v2248 = vadd.f32 %v966, %v2210
  %v2249 = vadd.f32 %v971, %v2215
  %v2250 = vadd.f32 %v974, %v2218
  %v2251 = vadd.f32 %v979, %v2223
  %v2252 = vadd.f32 %v982, %v2226
  %v2253 = vadd.f32 %v987, %v2231
  %v2254 = vadd.f32 %v990, %v2234
  %v2255 = vadd.f32 %v995, %v2239
  %v2256 = vadd.f32 %v998, %v2242
  %v2257 = vpack.c.bf16 %v2246, %v2245
  %v2258 = vpack.c.bf16 %v2248, %v2247
  %v2259 = vpack.c.bf16 %v2250, %v2249
  %v2260 = vpack.c.bf16 %v2252, %v2251
  %v2261 = vpack.c.bf16 %v2254, %v2253
  %v2262 = vpack.c.bf16 %v2256, %v2255
  %v2264 = vsel %vm456, %v2257, 0
  %v2267 = vsel %vm456, %v2258, 0
  %v2270 = vsel %vm456, %v2259, 0
  %v2273 = vsel %vm456, %v2260, 0
  %v2276 = vsel %vm456, %v2261, 0
  %v2279 = vsel %vm456, %v2262, 0
  %2281 = vmatprep.subr.bf16.mxu0 0
  %2282 = vmatpush1.bf16.msra.mxu0 0
  %2283 = vmatprep.subr.bf16.mxu0 0
  %2284 = vmatpush1.bf16.msra.mxu0 0
  %2285 = vmatprep.subr.bf16.mxu0 0
  %2286 = vmatpush1.bf16.msra.mxu0 0
  %2287 = vmatprep.subr.bf16.mxu0 0
  %2288 = vmatpush1.bf16.msra.mxu0 0
  %2289 = vmatprep.subr.bf16.mxu0 0
  %2290 = vmatpush1.bf16.msra.mxu0 0
  %2291 = vmatprep.subr.bf16.mxu0 0
  %2292 = vmatpush1.bf16.msra.mxu0 0
  %2293 = vmatprep.subr.bf16.mxu0 0
  %2294 = vmatpush1.bf16.msra.mxu0 %v1577
  %2295 = vmatprep.subr.bf16.mxu0 0
  %2296 = vmatpush1.bf16.msra.mxu0 %v1576
  %2297 = vmatprep.subr.bf16.mxu0 0
  %2298 = vmatpush2.bf16.msra.mxu0 0
  %2299 = vmatprep.subr.bf16.mxu0 0
  %2300 = vmatpush2.bf16.msra.mxu0 0
  %2301 = vmatprep.subr.bf16.mxu0 0
  %2302 = vmatpush2.bf16.msra.mxu0 0
  %2303 = vmatprep.subr.bf16.mxu0 0
  %2304 = vmatpush2.bf16.msra.mxu0 0
  %2305 = vmatprep.subr.bf16.mxu0 0
  %2306 = vmatpush2.bf16.msra.mxu0 0
  %2307 = vmatprep.subr.bf16.mxu0 0
  %2308 = vmatpush2.bf16.msra.mxu0 0
  %2309 = vmatprep.subr.bf16.mxu0 0
  %2310 = vmatpush2.bf16.msra.mxu0 0
  %2311 = vmatprep.subr.bf16.mxu0 0
  %2312 = vmatpush2.bf16.msra.mxu0 0
  %2313 = vmatprep.mubr.bf16.mxu0 0
  %2314 = vmatmul.mubr.bf16.gmra.mxu0 %v2264
  %v2315 = vpop.f32.mrf.mxu0
  %v2316 = vadd.f32 %v1581, %v2315
  %v2317 = vpop.f32.mrf.mxu0
  %v2318 = vpop.f32.mrf.mxu0
  %v2319 = vadd.f32 %v1581, %v2318
  %v2320 = vpop.f32.mrf.mxu0
  %2321 = vmatprep.mubr.bf16.mxu0 0
  %2322 = vmatmul.mubr.bf16.gmra.mxu0 %v2267
  %v2323 = vpop.f32.mrf.mxu0
  %v2324 = vadd.f32 %v1581, %v2323
  %v2325 = vpop.f32.mrf.mxu0
  %v2326 = vpop.f32.mrf.mxu0
  %v2327 = vadd.f32 %v1581, %v2326
  %v2328 = vpop.f32.mrf.mxu0
  %2329 = vmatprep.mubr.bf16.mxu0 0
  %2330 = vmatmul.mubr.bf16.gmra.mxu0 %v2270
  %v2331 = vpop.f32.mrf.mxu0
  %v2332 = vadd.f32 %v1581, %v2331
  %v2333 = vpop.f32.mrf.mxu0
  %v2334 = vpop.f32.mrf.mxu0
  %v2335 = vadd.f32 %v1581, %v2334
  %v2336 = vpop.f32.mrf.mxu0
  %2337 = vmatprep.mubr.bf16.mxu0 0
  %2338 = vmatmul.mubr.bf16.gmra.mxu0 %v2273
  %v2339 = vpop.f32.mrf.mxu0
  %v2340 = vadd.f32 %v1581, %v2339
  %v2341 = vpop.f32.mrf.mxu0
  %v2342 = vpop.f32.mrf.mxu0
  %v2343 = vadd.f32 %v1581, %v2342
  %v2344 = vpop.f32.mrf.mxu0
  %2345 = vmatprep.mubr.bf16.mxu0 0
  %2346 = vmatmul.mubr.bf16.gmra.mxu0 %v2276
  %v2347 = vpop.f32.mrf.mxu0
  %v2348 = vadd.f32 %v1581, %v2347
  %v2349 = vpop.f32.mrf.mxu0
  %v2350 = vpop.f32.mrf.mxu0
  %v2351 = vadd.f32 %v1581, %v2350
  %v2352 = vpop.f32.mrf.mxu0
  %2353 = vmatprep.mubr.bf16.mxu0 0
  %2354 = vmatmul.mubr.bf16.gmra.mxu0 %v2279
  %v2355 = vpop.f32.mrf.mxu0
  %v2356 = vadd.f32 %v1581, %v2355
  %v2357 = vpop.f32.mrf.mxu0
  %v2358 = vpop.f32.mrf.mxu0
  %v2359 = vadd.f32 %v1581, %v2358
  %v2360 = vpop.f32.mrf.mxu0
  %2361 = vdwg.mxu0
  %2362 = vst [vmem:[%s2 + $0x60] sm:$0xff] %v2316
  %2363 = vst [vmem:[%s2 + $0x68] sm:$0xff] %v2319
  %2364 = vst [vmem:[%s2 + $0x70] sm:$0xff] %v2324
  %2365 = vst [vmem:[%s2 + $0x78] sm:$0xff] %v2327
  %2366 = vst [vmem:[%s2 + $0x80] sm:$0xff] %v2332
  %2367 = vst [vmem:[%s2 + $0x88] sm:$0xff] %v2335
  %2368 = vst [vmem:[%s2 + $0x90] sm:$0xff] %v2340
  %2369 = vst [vmem:[%s2 + $0x98] sm:$0xff] %v2343
  %2370 = vst [vmem:[%s2 + $0xa0] sm:$0xff] %v2348
  %2371 = vst [vmem:[%s2 + $0xa8] sm:$0xff] %v2351
  %2372 = vst [vmem:[%s2 + $0xb0] sm:$0xff] %v2356
  %2373 = vst [vmem:[%s2 + $0xb8] sm:$0xff] %v2359
  // Predicated region
  $region10: #{logits_only_forward.1} parent=0 // pred_check
    _
  $region11: #{logits_only_forward.1} parent=0 // pred_check_branch
    %2375 = sbr.rel (0) target = $region13
  $region12: #{logits_only_forward.1} parent=0 // pred_region
    _
  $region13: #{logits_only_forward.1} parent=0 // pred_fallthru
    _
  // Predicated region
  $region14: #{logits_only_forward.1} parent=0 // pred_check
    _
  $region15: #{logits_only_forward.1} parent=0 // pred_check_branch
    %2377 = sbr.rel (0) target = $region17
  $region16: #{logits_only_forward.1} parent=0 // pred_region
    _
  $region17: #{logits_only_forward.1} parent=0 // pred_fallthru
    _

</llo_original>
